<compile_context>
chip_gen: v6e
topology: v6e:2x2x1
jax: 0.10.0
libtpu: 0.0.40
codegen_flags: <defaults>
</compile_context>

<pallas_src>
import functools

import jax
import jax.numpy as jnp
import numpy as np
from jax.experimental import pallas as pl
from jax.experimental.pallas import tpu as pltpu

_MIB = 2 ** 20


# ----------------------------------------------------------------------------
# small math helpers (shared by kernel and pure-JAX reference)
# ----------------------------------------------------------------------------
def _gelu_new(x):
    # HF ACT2FN["gelu_new"]: tanh approximation of GELU.
    return 0.5 * x * (1.0 + jnp.tanh(
        0.7978845608028654 * (x + 0.044715 * x * x * x)))


def _rms_norm(x, gain, eps):
    # T5-style LayerNorm: no mean subtraction, no bias; statistics in f32.
    var = jnp.mean(x * x, axis=-1, keepdims=True)
    return (x * jax.lax.rsqrt(var + eps)) * gain


def _split_heads(t, n_heads, d_head):
    # (N, D) f32 -> (H, N, d_head) bf16 (cast first so the relayout is half-size).
    n = t.shape[0]
    t = t.astype(jnp.bfloat16).reshape(n, n_heads, d_head)
    return jnp.transpose(t, (1, 0, 2))


# ----------------------------------------------------------------------------
# hardware-derived configuration
# ----------------------------------------------------------------------------
@functools.lru_cache(maxsize=None)
def _vmem_capacity_bytes():
    try:
        cap = getattr(pltpu.get_tpu_info(), "vmem_capacity_bytes", None)
        if cap:
            return int(cap)
    except Exception:
        pass
    return 64 * _MIB  # conservative: smallest per-core VMEM among v5e/v6e/v7x


def _default_q_tile():
    # Larger tiles amortize the ~0.35us/step overhead on 128-MiB-VMEM parts
    # (v5e/v6e); keep 128 on 64-MiB parts (v7x) so (H,TQ,S) score tiles stay
    # bounded.
    return 256 if _vmem_capacity_bytes() >= 96 * _MIB else 128


def _pick_q_tile(seq_len, target):
    """Query-tile size: full sequence when short, else a multiple of 8.

    The grid uses pl.cdiv so a ragged last tile is handled by Pallas boundary
    masking (no silent fallback to full-(S,S) scores)."""
    if seq_len <= target:
        return seq_len
    return max(8, (target // 8) * 8)


@functools.lru_cache(maxsize=None)
def _single_buffer_weights_supported():
    """Trace/AOT-compile-time capability check for pl.Buffered(1) weight blocks.

    Lowers and compiles a tiny dummy kernel (never executes it, never probes
    with the real layer kernel), so a missing feature cannot be confused with
    a genuine error in the production kernel."""
    def _copy(w_ref, o_ref):
        o_ref[...] = w_ref[...]

    try:
        fn = pl.pallas_call(
            _copy,
            out_shape=jax.ShapeDtypeStruct((8, 128), jnp.float32),
            grid=(2,),
            in_specs=[pl.BlockSpec((8, 128), lambda i: (0, 0),
                                   pipeline_mode=pl.Buffered(1))],
            out_specs=pl.BlockSpec((8, 128), lambda i: (0, 0)),
        )
        jax.jit(fn).lower(jax.ShapeDtypeStruct((8, 128), jnp.float32)).compile()
        return True
    except Exception:
        return False


def _vmem_limit(S, D, M, H, tq, single_buffer_weights):
    """Scoped-VMEM request: generous but below physical, per generation."""
    dh = D // H
    wbuf = 1 if single_buffer_weights else 2
    weight_bytes = wbuf * (2 * (4 * D * D + 2 * D * M + M * D) + 4 * 2 * D)
    act_f32 = (3 * S * D                # x_full + k + v (qi == 0 step)
               + 2 * H * tq * S         # scores + exp(scores - max)
               + 2 * tq * M             # gelu / linear MLP branches
               + 8 * tq * D)            # q, x_q, ctx, attn_out, h1, hn, mlp, ...
    act_bf16 = (S * D                   # xn_kv
                + 2 * H * S * dh        # kh / vh persistent scratch
                + H * tq * S            # bf16 probabilities
                + tq * M + 2 * tq * D)
    io_bytes = 4 * (2 * S * D + 2 * tq * D + 2 * tq * D)  # pipelined in/out blocks
    needed = weight_bytes + 4 * act_f32 + 2 * act_bf16 + io_bytes
    cap = _vmem_capacity_bytes()
    ceiling = cap - max(8 * _MIB, cap // 8)   # ~56 MiB on v7x, ~112 MiB on v5e/v6e
    return int(max(16 * _MIB, min(ceiling, max(32 * _MIB, 2 * needed))))


# ----------------------------------------------------------------------------
# fused encoder-layer kernel
# ----------------------------------------------------------------------------
def _vision_layer_kernel(xfull_ref, xq_ref, g1_ref, wq_ref, wk_ref, wv_ref,
                         wo_ref, g2_ref, wi0_ref, wi1_ref, wmo_ref,
                         o_ref, kh_ref, vh_ref, *, n_heads, eps):
    S = xfull_ref.shape[1]
    D = xfull_ref.shape[2]
    TQ = xq_ref.shape[1]
    d_head = D // n_heads

    g1 = g1_ref[0].astype(jnp.float32)
    g2 = g2_ref[0].astype(jnp.float32)

    # ---- K / V (and the full-sequence RMSNorm feeding them) are computed
    # once per batch element and kept resident in VMEM scratch; the query
    # grid axis is "arbitrary" so the scratch persists across query tiles. ----
    @pl.when(pl.program_id(1) == 0)
    def _compute_kv():
        x_full = xfull_ref[0].astype(jnp.float32)                    # (S, D)
        xn_kv = _rms_norm(x_full, g1, eps).astype(jnp.bfloat16)      # (S, D) bf16
        k = jnp.dot(xn_kv, wk_ref[...], preferred_element_type=jnp.float32)
        v = jnp.dot(xn_kv, wv_ref[...], preferred_element_type=jnp.float32)
        kh_ref[...] = _split_heads(k, n_heads, d_head)               # (H, S, dh)
        vh_ref[...] = _split_heads(v, n_heads, d_head)               # (H, S, dh)

    # ---- per-query-tile work ----
    x_q = xq_ref[0].astype(jnp.float32)                              # (TQ, D)
    xn_q = _rms_norm(x_q, g1, eps).astype(jnp.bfloat16)
    q = jnp.dot(xn_q, wq_ref[...], preferred_element_type=jnp.float32)
    qh = _split_heads(q, n_heads, d_head)                            # (H, TQ, dh)

    kh = kh_ref[...]
    vh = vh_ref[...]

    # Head-batched scores; Pix2Struct applies no 1/sqrt(d) scaling and the
    # position bias is identically zero for the mask=None path.
    s = jnp.einsum('hqd,hkd->hqk', qh, kh,
                   preferred_element_type=jnp.float32)               # (H,TQ,S) f32
    m = jnp.max(s, axis=-1, keepdims=True)
    p = jnp.exp(s - m)                                               # f32
    l = jnp.sum(p, axis=-1, keepdims=True)                           # (H,TQ,1) f32
    # PV matmul on un-normalized bf16 probabilities; normalize afterwards so
    # the VPU divide touches H*TQ*dh elements instead of H*TQ*S.
    ctx = jnp.einsum('hqk,hkd->hqd', p.astype(jnp.bfloat16), vh,
                     preferred_element_type=jnp.float32)             # (H,TQ,dh)
    # TODO(synk): approximate EUP reciprocal -> not bit-exact vs the reference.
    ctx = ctx * pl.reciprocal(l, approx=True)

    # Merge heads back to a (TQ, D) bf16 tile and run ONE output projection
    # against the un-reshaped (D, D) Wo at full MXU contraction depth.
    ctx = jnp.transpose(ctx.astype(jnp.bfloat16), (1, 0, 2)).reshape(TQ, D)
    attn_out = jnp.dot(ctx, wo_ref[...], preferred_element_type=jnp.float32)

    h1 = attn_out + x_q                                              # residual (f32)

    # ---- pre-MLP RMSNorm + gated gelu_new MLP + residual ----
    hn = _rms_norm(h1, g2, eps).astype(jnp.bfloat16)
    gact = _gelu_new(jnp.dot(hn, wi0_ref[...], preferred_element_type=jnp.float32))
    lin = jnp.dot(hn, wi1_ref[...], preferred_element_type=jnp.float32)
    mlp = jnp.dot((gact * lin).astype(jnp.bfloat16), wmo_ref[...],
                  preferred_element_type=jnp.float32)                # (TQ, D)

    o_ref[0] = (mlp + h1).astype(o_ref.dtype)


def vision_layer(x, p, *, n_heads, eps=1e-6, q_tile=None):
    """One Pix2StructVisionLayer forward. `p` must come from prepare_params."""
    B, S, D = x.shape
    M = p["wi0"].shape[1]
    d_head = D // n_heads
    if q_tile is None:
        q_tile = _default_q_tile()
    tq = _pick_q_tile(S, q_tile)
    n_qt = pl.cdiv(S, tq)

    single_buf = _single_buffer_weights_supported()
    vmem_limit = _vmem_limit(S, D, M, n_heads, tq, single_buf)

    def wspec(shape):
        ndim = len(shape)
        index_map = lambda b, qi, _n=ndim: (0,) * _n
        if single_buf:
            # Constant block index -> one resident VMEM copy is enough.
            return pl.BlockSpec(shape, index_map, pipeline_mode=pl.Buffered(1))
        return pl.BlockSpec(shape, index_map)

    kernel = functools.partial(_vision_layer_kernel, n_heads=n_heads, eps=eps)

    return pl.pallas_call(
        kernel,
        out_shape=jax.ShapeDtypeStruct((B, S, D), x.dtype),
        grid=(B, n_qt),
        in_specs=[
            # full sequence (fetched once per batch element; feeds K/V)
            pl.BlockSpec((1, S, D), lambda b, qi: (b, 0, 0)),
            # query tile (ragged last tile handled by Pallas boundary masking)
            pl.BlockSpec((1, tq, D), lambda b, qi: (b, qi, 0)),
            wspec((1, D)),                                        # pre-attn LN gain
            wspec((D, D)), wspec((D, D)), wspec((D, D)),          # Wq, Wk, Wv
            wspec((D, D)),                                        # Wo
            wspec((1, D)),                                        # pre-MLP LN gain
            wspec((D, M)), wspec((D, M)),                         # wi_0, wi_1
            wspec((M, D)),                                        # wo (mlp)
        ],
        out_specs=pl.BlockSpec((1, tq, D), lambda b, qi: (b, qi, 0)),
        scratch_shapes=[pltpu.VMEM((n_heads, S, d_head), jnp.bfloat16),   # K heads
                        pltpu.VMEM((n_heads, S, d_head), jnp.bfloat16)],  # V heads
        compiler_params=pltpu.CompilerParams(
            dimension_semantics=("parallel", "arbitrary"),
            vmem_limit_bytes=vmem_limit),
    )(x, x, p["g1"], p["wq"], p["wk"], p["wv"], p["wo"], p["g2"],
      p["wi0"], p["wi1"], p["wmo"])


# ----------------------------------------------------------------------------
# parameter handling and encoder wrapper
# ----------------------------------------------------------------------------
def prepare_params(params):
    """One-time cast to kernel-ready dtypes (bf16 weights, f32 (1,D) gains).

    Doing this once at load time avoids per-forward HBM convert traffic."""
    prepped = []
    for p in params:
        prepped.append({
            "g1": jnp.asarray(p["g1"], jnp.float32).reshape(1, -1),
            "g2": jnp.asarray(p["g2"], jnp.float32).reshape(1, -1),
            "wq": jnp.asarray(p["wq"], jnp.bfloat16),
            "wk": jnp.asarray(p["wk"], jnp.bfloat16),
            "wv": jnp.asarray(p["wv"], jnp.bfloat16),
            "wo": jnp.asarray(p["wo"], jnp.bfloat16),
            "wi0": jnp.asarray(p["wi0"], jnp.bfloat16),
            "wi1": jnp.asarray(p["wi1"], jnp.bfloat16),
            "wmo": jnp.asarray(p["wmo"], jnp.bfloat16),
        })
    return prepped


def pix2struct_vision_encoder(x, params, *, n_heads, eps=1e-6, q_tile=None,
                              params_prepared=False):
    # Encoder = sequential stack of layers; only the final hidden_states returned.
    if not params_prepared:
        params = prepare_params(params)
    for p in params:
        x = vision_layer(x, p, n_heads=n_heads, eps=eps, q_tile=q_tile)
    return x


def init_params(key, num_layers, hidden, mlp_dim):
    # Deterministic synthetic parameters (LayerNorm gains = ones like the
    # module's __init__; linear weights ~ N(0, 0.02^2), stored as (in, out)).
    params = []
    for i in range(num_layers):
        ks = jax.random.split(jax.random.fold_in(key, i), 7)
        s = 0.02
        params.append({
            "g1": jnp.ones((hidden,), jnp.float32),
            "wq": s * jax.random.normal(ks[0], (hidden, hidden), jnp.float32),
            "wk": s * jax.random.normal(ks[1], (hidden, hidden), jnp.float32),
            "wv": s * jax.random.normal(ks[2], (hidden, hidden), jnp.float32),
            "wo": s * jax.random.normal(ks[3], (hidden, hidden), jnp.float32),
            "g2": jnp.ones((hidden,), jnp.float32),
            "wi0": s * jax.random.normal(ks[4], (hidden, mlp_dim), jnp.float32),
            "wi1": s * jax.random.normal(ks[5], (hidden, mlp_dim), jnp.float32),
            "wmo": s * jax.random.normal(ks[6], (mlp_dim, hidden), jnp.float32),
        })
    return params


def _reference_encoder(x, params, *, n_heads, eps=1e-6):
    """Pure-JAX f32 reference of the PyTorch module (mask=None, eval mode)."""
    B, S, D = x.shape
    dh = D // n_heads
    for p in params:
        g1 = jnp.asarray(p["g1"], jnp.float32).reshape(-1)
        g2 = jnp.asarray(p["g2"], jnp.float32).reshape(-1)
        xn = _rms_norm(x, g1, eps)
        q, k, v = xn @ p["wq"], xn @ p["wk"], xn @ p["wv"]

        def heads(t):
            return jnp.transpose(t.reshape(B, S, n_heads, dh), (0, 2, 1, 3))

        qh, kh, vh = heads(q), heads(k), heads(v)
        s = jnp.einsum('bhqd,bhkd->bhqk', qh, kh)
        w = jax.nn.softmax(s, axis=-1)
        ctx = jnp.einsum('bhqk,bhkd->bhqd', w, vh)
        ctx = jnp.transpose(ctx, (0, 2, 1, 3)).reshape(B, S, D)
        h1 = ctx @ p["wo"] + x
        hn = _rms_norm(h1, g2, eps)
        x = (_gelu_new(hn @ p["wi0"]) * (hn @ p["wi1"])) @ p["wmo"] + h1
    return x


if __name__ == "__main__":
    # Small config consistent with the module: hidden=32, 4 heads, 2 layers,
    # mlp_hidden = 4 * hidden = 128, batch=2, seq=8.
    B, S, D = 2, 8, 32
    n_heads = 4
    num_layers = 2
    mlp_dim = 4 * D

    key = jax.random.PRNGKey(0)
    x = jax.random.normal(jax.random.fold_in(key, 123), (B, S, D), jnp.float32)
    params = init_params(key, num_layers, D, mlp_dim)

    out = pix2struct_vision_encoder(x, params, n_heads=n_heads, eps=1e-6)
    out = jax.block_until_ready(out)
    assert out.shape == (B, S, D) and out.dtype == jnp.float32

    # Loose-tolerance check vs the f32 pure-JAX reference (bf16 weights /
    # probabilities and the approximate reciprocal are intentional).
    ref = _reference_encoder(x, params, n_heads=n_heads, eps=1e-6)
    err = float(np.max(np.abs(np.asarray(out) - np.asarray(ref))))
    assert err < 5e-2, f"max abs error {err}"

    print("KERNEL_OK")
</pallas_src>

<mosaic_0001>
module attributes {stable_mosaic.version = 11 : i64} {
  func.func @_vision_layer_kernel(%arg0: i32, %arg1: i32, %arg2: memref<1x8x32xf32, #tpu.memory_space<vmem>>, %arg3: memref<1x8x32xf32, #tpu.memory_space<vmem>>, %arg4: memref<1x32xf32, #tpu.memory_space<vmem>>, %arg5: memref<32x32xbf16, #tpu.memory_space<vmem>>, %arg6: memref<32x32xbf16, #tpu.memory_space<vmem>>, %arg7: memref<32x32xbf16, #tpu.memory_space<vmem>>, %arg8: memref<32x32xbf16, #tpu.memory_space<vmem>>, %arg9: memref<1x32xf32, #tpu.memory_space<vmem>>, %arg10: memref<32x128xbf16, #tpu.memory_space<vmem>>, %arg11: memref<32x128xbf16, #tpu.memory_space<vmem>>, %arg12: memref<128x32xbf16, #tpu.memory_space<vmem>>, %arg13: memref<1x8x32xf32, #tpu.memory_space<vmem>>, %arg14: memref<4x8x8xbf16, #tpu.memory_space<vmem>>, %arg15: memref<4x8x8xbf16, #tpu.memory_space<vmem>>) attributes {dimension_semantics = [#tpu.dimension_semantics<parallel>, #tpu.dimension_semantics<arbitrary>], iteration_bounds = array<i64: 2, 1>, scalar_prefetch = 0 : i64, scratch_operands = 2 : i64, tpu.core_type = #tpu.core_type<tc>, window_params = [{transform_indices = @transform_0, window_bounds = array<i64: 1, 8, 32>}, {transform_indices = @transform_1, window_bounds = array<i64: 1, 8, 32>}, {pipeline_mode = #tpu.pipeline_mode<synchronous>, transform_indices = @transform_2, window_bounds = array<i64: 1, 32>}, {pipeline_mode = #tpu.pipeline_mode<synchronous>, transform_indices = @transform_3, window_bounds = array<i64: 32, 32>}, {pipeline_mode = #tpu.pipeline_mode<synchronous>, transform_indices = @transform_4, window_bounds = array<i64: 32, 32>}, {pipeline_mode = #tpu.pipeline_mode<synchronous>, transform_indices = @transform_5, window_bounds = array<i64: 32, 32>}, {pipeline_mode = #tpu.pipeline_mode<synchronous>, transform_indices = @transform_6, window_bounds = array<i64: 32, 32>}, {pipeline_mode = #tpu.pipeline_mode<synchronous>, transform_indices = @transform_7, window_bounds = array<i64: 1, 32>}, {pipeline_mode = #tpu.pipeline_mode<synchronous>, transform_indices = @transform_8, window_bounds = array<i64: 32, 128>}, {pipeline_mode = #tpu.pipeline_mode<synchronous>, transform_indices = @transform_9, window_bounds = array<i64: 32, 128>}, {pipeline_mode = #tpu.pipeline_mode<synchronous>, transform_indices = @transform_10, window_bounds = array<i64: 128, 32>}, {transform_indices = @transform_11, window_bounds = array<i64: 1, 8, 32>}]} {
    %c0 = arith.constant 0 : index
    %c0_0 = arith.constant 0 : index
    %0 = vector.load %arg4[%c0, %c0_0] : memref<1x32xf32, #tpu.memory_space<vmem>>, vector<1x32xf32>
    %1 = vector.shape_cast %0 : vector<1x32xf32> to vector<32xf32>
    %c0_1 = arith.constant 0 : index
    %c0_2 = arith.constant 0 : index
    %2 = vector.load %arg9[%c0_1, %c0_2] : memref<1x32xf32, #tpu.memory_space<vmem>>, vector<1x32xf32>
    %3 = vector.shape_cast %2 : vector<1x32xf32> to vector<32xf32>
    %c0_i32 = arith.constant 0 : i32
    %4 = arith.cmpi eq, %arg1, %c0_i32 : i32
    %5 = arith.extui %4 : i1 to i32
    %c0_i32_3 = arith.constant 0 : i32
    %6 = arith.cmpi ne, %5, %c0_i32_3 : i32
    scf.if %6 {
      %c0_44 = arith.constant 0 : index
      %c0_45 = arith.constant 0 : index
      %c0_46 = arith.constant 0 : index
      %88 = vector.load %arg2[%c0_44, %c0_45, %c0_46] : memref<1x8x32xf32, #tpu.memory_space<vmem>>, vector<1x8x32xf32>
      %89 = vector.shape_cast %88 : vector<1x8x32xf32> to vector<8x32xf32>
      %90 = arith.mulf %89, %89 : vector<8x32xf32>
      %cst_47 = arith.constant dense<0.000000e+00> : vector<8xf32>
      %91 = vector.multi_reduction <add>, %90, %cst_47 [1] : vector<8x32xf32> to vector<8xf32>
      %92 = vector.shape_cast %91 : vector<8xf32> to vector<8x1xf32>
      %cst_48 = arith.constant 3.200000e+01 : f32
      %93 = vector.broadcast %cst_48 : f32 to vector<8x1xf32>
      %94 = arith.divf %92, %93 : vector<8x1xf32>
      %cst_49 = arith.constant 9.99999997E-7 : f32
      %95 = vector.broadcast %cst_49 : f32 to vector<8x1xf32>
      %96 = arith.addf %94, %95 : vector<8x1xf32>
      %97 = math.rsqrt %96 : vector<8x1xf32>
      %98 = vector.broadcast %97 : vector<8x1xf32> to vector<8x32xf32>
      %99 = arith.mulf %89, %98 : vector<8x32xf32>
      %100 = vector.shape_cast %1 : vector<32xf32> to vector<1x32xf32>
      %101 = vector.broadcast %100 : vector<1x32xf32> to vector<8x32xf32>
      %102 = arith.mulf %99, %101 : vector<8x32xf32>
      %103 = arith.truncf %102 : vector<8x32xf32> to vector<8x32xbf16>
      %c0_50 = arith.constant 0 : index
      %c0_51 = arith.constant 0 : index
      %104 = vector.load %arg6[%c0_50, %c0_51] : memref<32x32xbf16, #tpu.memory_space<vmem>>, vector<32x32xbf16>
      %cst_52 = arith.constant dense<0.000000e+00> : vector<8x32xf32>
      %105 = tpu.matmul %103, %104, %cst_52 {dimension_numbers = #tpu.dot_dimension_numbers<[1], [0], [0], [1], [0, 0, 1, 1], [], []>} : vector<8x32xbf16>, vector<32x32xbf16>, vector<8x32xf32> -> vector<8x32xf32>
      %c0_53 = arith.constant 0 : index
      %c0_54 = arith.constant 0 : index
      %106 = vector.load %arg7[%c0_53, %c0_54] : memref<32x32xbf16, #tpu.memory_space<vmem>>, vector<32x32xbf16>
      %cst_55 = arith.constant dense<0.000000e+00> : vector<8x32xf32>
      %107 = tpu.matmul %103, %106, %cst_55 {dimension_numbers = #tpu.dot_dimension_numbers<[1], [0], [0], [1], [0, 0, 1, 1], [], []>} : vector<8x32xbf16>, vector<32x32xbf16>, vector<8x32xf32> -> vector<8x32xf32>
      %108 = arith.truncf %105 : vector<8x32xf32> to vector<8x32xbf16>
      %109 = vector.shape_cast %108 : vector<8x32xbf16> to vector<8x4x8xbf16>
      %110 = tpu.transpose %109, [1, 0, 2] : vector<8x4x8xbf16> -> vector<4x8x8xbf16>
      %c0_56 = arith.constant 0 : index
      %c0_57 = arith.constant 0 : index
      %c0_58 = arith.constant 0 : index
      %111 = vector.load %arg14[%c0_56, %c0_57, %c0_58] : memref<4x8x8xbf16, #tpu.memory_space<vmem>>, vector<4x8x8xbf16>
      tpu.vector_store %arg14[%c0_56, %c0_57, %c0_58], %110 {strides = array<i32>} : memref<4x8x8xbf16, #tpu.memory_space<vmem>>, vector<4x8x8xbf16>,
      %112 = arith.truncf %107 : vector<8x32xf32> to vector<8x32xbf16>
      %113 = vector.shape_cast %112 : vector<8x32xbf16> to vector<8x4x8xbf16>
      %114 = tpu.transpose %113, [1, 0, 2] : vector<8x4x8xbf16> -> vector<4x8x8xbf16>
      %c0_59 = arith.constant 0 : index
      %c0_60 = arith.constant 0 : index
      %c0_61 = arith.constant 0 : index
      %115 = vector.load %arg15[%c0_59, %c0_60, %c0_61] : memref<4x8x8xbf16, #tpu.memory_space<vmem>>, vector<4x8x8xbf16>
      tpu.vector_store %arg15[%c0_59, %c0_60, %c0_61], %114 {strides = array<i32>} : memref<4x8x8xbf16, #tpu.memory_space<vmem>>, vector<4x8x8xbf16>,
    } else {
    }
    %c0_4 = arith.constant 0 : index
    %c0_5 = arith.constant 0 : index
    %c0_6 = arith.constant 0 : index
    %7 = vector.load %arg3[%c0_4, %c0_5, %c0_6] : memref<1x8x32xf32, #tpu.memory_space<vmem>>, vector<1x8x32xf32>
    %8 = vector.shape_cast %7 : vector<1x8x32xf32> to vector<8x32xf32>
    %9 = arith.mulf %8, %8 : vector<8x32xf32>
    %cst = arith.constant dense<0.000000e+00> : vector<8xf32>
    %10 = vector.multi_reduction <add>, %9, %cst [1] : vector<8x32xf32> to vector<8xf32>
    %11 = vector.shape_cast %10 : vector<8xf32> to vector<8x1xf32>
    %cst_7 = arith.constant 3.200000e+01 : f32
    %12 = vector.broadcast %cst_7 : f32 to vector<8x1xf32>
    %13 = arith.divf %11, %12 : vector<8x1xf32>
    %cst_8 = arith.constant 9.99999997E-7 : f32
    %14 = vector.broadcast %cst_8 : f32 to vector<8x1xf32>
    %15 = arith.addf %13, %14 : vector<8x1xf32>
    %16 = math.rsqrt %15 : vector<8x1xf32>
    %17 = vector.broadcast %16 : vector<8x1xf32> to vector<8x32xf32>
    %18 = arith.mulf %8, %17 : vector<8x32xf32>
    %19 = vector.shape_cast %1 : vector<32xf32> to vector<1x32xf32>
    %20 = vector.broadcast %19 : vector<1x32xf32> to vector<8x32xf32>
    %21 = arith.mulf %18, %20 : vector<8x32xf32>
    %22 = arith.truncf %21 : vector<8x32xf32> to vector<8x32xbf16>
    %c0_9 = arith.constant 0 : index
    %c0_10 = arith.constant 0 : index
    %23 = vector.load %arg5[%c0_9, %c0_10] : memref<32x32xbf16, #tpu.memory_space<vmem>>, vector<32x32xbf16>
    %cst_11 = arith.constant dense<0.000000e+00> : vector<8x32xf32>
    %24 = tpu.matmul %22, %23, %cst_11 {dimension_numbers = #tpu.dot_dimension_numbers<[1], [0], [0], [1], [0, 0, 1, 1], [], []>} : vector<8x32xbf16>, vector<32x32xbf16>, vector<8x32xf32> -> vector<8x32xf32>
    %25 = arith.truncf %24 : vector<8x32xf32> to vector<8x32xbf16>
    %26 = vector.shape_cast %25 : vector<8x32xbf16> to vector<8x4x8xbf16>
    %27 = tpu.transpose %26, [1, 0, 2] : vector<8x4x8xbf16> -> vector<4x8x8xbf16>
    %c0_12 = arith.constant 0 : index
    %c0_13 = arith.constant 0 : index
    %c0_14 = arith.constant 0 : index
    %28 = vector.load %arg14[%c0_12, %c0_13, %c0_14] : memref<4x8x8xbf16, #tpu.memory_space<vmem>>, vector<4x8x8xbf16>
    %c0_15 = arith.constant 0 : index
    %c0_16 = arith.constant 0 : index
    %c0_17 = arith.constant 0 : index
    %29 = vector.load %arg15[%c0_15, %c0_16, %c0_17] : memref<4x8x8xbf16, #tpu.memory_space<vmem>>, vector<4x8x8xbf16>
    "tpu.trace_start"() <{level = 10 : i32, message = "hqd,hkd->hqk"}> : () -> ()
    %cst_18 = arith.constant dense<0.000000e+00> : vector<4x8x8xf32>
    %30 = tpu.matmul %27, %28, %cst_18 {dimension_numbers = #tpu.dot_dimension_numbers<[2], [2], [1], [1], [0, 0, 0, 1, 1, 1], [0], [0]>} : vector<4x8x8xbf16>, vector<4x8x8xbf16>, vector<4x8x8xf32> -> vector<4x8x8xf32>
    "tpu.trace_stop"() : () -> ()
    %cst_19 = arith.constant dense<0xFF800000> : vector<4x8xf32>
    %31 = vector.multi_reduction <maximumf>, %30, %cst_19 [2] : vector<4x8x8xf32> to vector<4x8xf32>
    %32 = vector.shape_cast %31 : vector<4x8xf32> to vector<4x8x1xf32>
    %33 = vector.broadcast %32 : vector<4x8x1xf32> to vector<4x8x8xf32>
    %34 = arith.subf %30, %33 : vector<4x8x8xf32>
    %35 = math.exp %34 : vector<4x8x8xf32>
    %cst_20 = arith.constant dense<0.000000e+00> : vector<4x8xf32>
    %36 = vector.multi_reduction <add>, %35, %cst_20 [2] : vector<4x8x8xf32> to vector<4x8xf32>
    %37 = vector.shape_cast %36 : vector<4x8xf32> to vector<4x8x1xf32>
    %38 = arith.truncf %35 : vector<4x8x8xf32> to vector<4x8x8xbf16>
    "tpu.trace_start"() <{level = 10 : i32, message = "hqk,hkd->hqd"}> : () -> ()
    %cst_21 = arith.constant dense<0.000000e+00> : vector<4x8x8xf32>
    %39 = tpu.matmul %38, %29, %cst_21 {dimension_numbers = #tpu.dot_dimension_numbers<[2], [1], [1], [2], [0, 0, 0, 1, 1, 2], [0], [0]>} : vector<4x8x8xbf16>, vector<4x8x8xbf16>, vector<4x8x8xf32> -> vector<4x8x8xf32>
    "tpu.trace_stop"() : () -> ()
    %40 = tpu.reciprocal %37 {approx = true} : vector<4x8x1xf32> -> vector<4x8x1xf32>
    %41 = vector.broadcast %40 : vector<4x8x1xf32> to vector<4x8x8xf32>
    %42 = arith.mulf %39, %41 : vector<4x8x8xf32>
    %43 = arith.truncf %42 : vector<4x8x8xf32> to vector<4x8x8xbf16>
    %44 = tpu.transpose %43, [1, 0, 2] : vector<4x8x8xbf16> -> vector<8x4x8xbf16>
    %45 = vector.shape_cast %44 : vector<8x4x8xbf16> to vector<8x32xbf16>
    %c0_22 = arith.constant 0 : index
    %c0_23 = arith.constant 0 : index
    %46 = vector.load %arg8[%c0_22, %c0_23] : memref<32x32xbf16, #tpu.memory_space<vmem>>, vector<32x32xbf16>
    %cst_24 = arith.constant dense<0.000000e+00> : vector<8x32xf32>
    %47 = tpu.matmul %45, %46, %cst_24 {dimension_numbers = #tpu.dot_dimension_numbers<[1], [0], [0], [1], [0, 0, 1, 1], [], []>} : vector<8x32xbf16>, vector<32x32xbf16>, vector<8x32xf32> -> vector<8x32xf32>
    %48 = arith.addf %47, %8 : vector<8x32xf32>
    %49 = arith.mulf %48, %48 : vector<8x32xf32>
    %cst_25 = arith.constant dense<0.000000e+00> : vector<8xf32>
    %50 = vector.multi_reduction <add>, %49, %cst_25 [1] : vector<8x32xf32> to vector<8xf32>
    %51 = vector.shape_cast %50 : vector<8xf32> to vector<8x1xf32>
    %cst_26 = arith.constant 3.200000e+01 : f32
    %52 = vector.broadcast %cst_26 : f32 to vector<8x1xf32>
    %53 = arith.divf %51, %52 : vector<8x1xf32>
    %cst_27 = arith.constant 9.99999997E-7 : f32
    %54 = vector.broadcast %cst_27 : f32 to vector<8x1xf32>
    %55 = arith.addf %53, %54 : vector<8x1xf32>
    %56 = math.rsqrt %55 : vector<8x1xf32>
    %57 = vector.broadcast %56 : vector<8x1xf32> to vector<8x32xf32>
    %58 = arith.mulf %48, %57 : vector<8x32xf32>
    %59 = vector.shape_cast %3 : vector<32xf32> to vector<1x32xf32>
    %60 = vector.broadcast %59 : vector<1x32xf32> to vector<8x32xf32>
    %61 = arith.mulf %58, %60 : vector<8x32xf32>
    %62 = arith.truncf %61 : vector<8x32xf32> to vector<8x32xbf16>
    %c0_28 = arith.constant 0 : index
    %c0_29 = arith.constant 0 : index
    %63 = vector.load %arg10[%c0_28, %c0_29] : memref<32x128xbf16, #tpu.memory_space<vmem>>, vector<32x128xbf16>
    %cst_30 = arith.constant dense<0.000000e+00> : vector<8x128xf32>
    %64 = tpu.matmul %62, %63, %cst_30 {dimension_numbers = #tpu.dot_dimension_numbers<[1], [0], [0], [1], [0, 0, 1, 1], [], []>} : vector<8x32xbf16>, vector<32x128xbf16>, vector<8x128xf32> -> vector<8x128xf32>
    %cst_31 = arith.constant 5.000000e-01 : f32
    %65 = vector.broadcast %cst_31 : f32 to vector<8x128xf32>
    %66 = arith.mulf %65, %64 : vector<8x128xf32>
    %cst_32 = arith.constant 4.471500e-02 : f32
    %67 = vector.broadcast %cst_32 : f32 to vector<8x128xf32>
    %68 = arith.mulf %67, %64 : vector<8x128xf32>
    %69 = arith.mulf %68, %64 : vector<8x128xf32>
    %70 = arith.mulf %69, %64 : vector<8x128xf32>
    %71 = arith.addf %64, %70 : vector<8x128xf32>
    %cst_33 = arith.constant 0.797884583 : f32
    %72 = vector.broadcast %cst_33 : f32 to vector<8x128xf32>
    %73 = arith.mulf %72, %71 : vector<8x128xf32>
    %74 = math.tanh %73 : vector<8x128xf32>
    %cst_34 = arith.constant 1.000000e+00 : f32
    %75 = vector.broadcast %cst_34 : f32 to vector<8x128xf32>
    %76 = arith.addf %75, %74 : vector<8x128xf32>
    %77 = arith.mulf %66, %76 : vector<8x128xf32>
    %c0_35 = arith.constant 0 : index
    %c0_36 = arith.constant 0 : index
    %78 = vector.load %arg11[%c0_35, %c0_36] : memref<32x128xbf16, #tpu.memory_space<vmem>>, vector<32x128xbf16>
    %cst_37 = arith.constant dense<0.000000e+00> : vector<8x128xf32>
    %79 = tpu.matmul %62, %78, %cst_37 {dimension_numbers = #tpu.dot_dimension_numbers<[1], [0], [0], [1], [0, 0, 1, 1], [], []>} : vector<8x32xbf16>, vector<32x128xbf16>, vector<8x128xf32> -> vector<8x128xf32>
    %80 = arith.mulf %77, %79 : vector<8x128xf32>
    %81 = arith.truncf %80 : vector<8x128xf32> to vector<8x128xbf16>
    %c0_38 = arith.constant 0 : index
    %c0_39 = arith.constant 0 : index
    %82 = vector.load %arg12[%c0_38, %c0_39] : memref<128x32xbf16, #tpu.memory_space<vmem>>, vector<128x32xbf16>
    %cst_40 = arith.constant dense<0.000000e+00> : vector<8x32xf32>
    %83 = tpu.matmul %81, %82, %cst_40 {dimension_numbers = #tpu.dot_dimension_numbers<[1], [0], [0], [1], [0, 0, 1, 1], [], []>} : vector<8x128xbf16>, vector<128x32xbf16>, vector<8x32xf32> -> vector<8x32xf32>
    %84 = arith.addf %83, %48 : vector<8x32xf32>
    %c0_41 = arith.constant 0 : index
    %c0_42 = arith.constant 0 : index
    %c0_43 = arith.constant 0 : index
    %85 = vector.load %arg13[%c0_41, %c0_42, %c0_43] : memref<1x8x32xf32, #tpu.memory_space<vmem>>, vector<1x8x32xf32>
    %86 = vector.shape_cast %85 : vector<1x8x32xf32> to vector<8x32xf32>
    %87 = vector.shape_cast %84 : vector<8x32xf32> to vector<1x8x32xf32>
    tpu.vector_store %arg13[%c0_41, %c0_42, %c0_43], %87 {strides = array<i32>} : memref<1x8x32xf32, #tpu.memory_space<vmem>>, vector<1x8x32xf32>,
    return
  }
  func.func @transform_0(%arg0: i32, %arg1: i32) -> (i32, i32, i32) {
    %c0_i32 = arith.constant 0 : i32
    %c0_i32_0 = arith.constant 0 : i32
    %c0_i32_1 = arith.constant 0 : i32
    return %arg0, %c0_i32, %c0_i32_0 : i32, i32, i32
  }
  func.func @transform_1(%arg0: i32, %arg1: i32) -> (i32, i32, i32) {
    %c0_i32 = arith.constant 0 : i32
    %c0_i32_0 = arith.constant 0 : i32
    return %arg0, %arg1, %c0_i32 : i32, i32, i32
  }
  func.func @transform_2(%arg0: i32, %arg1: i32) -> (i32, i32) {
    %c0_i32 = arith.constant 0 : i32
    %c0_i32_0 = arith.constant 0 : i32
    %c0_i32_1 = arith.constant 0 : i32
    return %c0_i32, %c0_i32_0 : i32, i32
  }
  func.func @transform_3(%arg0: i32, %arg1: i32) -> (i32, i32) {
    %c0_i32 = arith.constant 0 : i32
    %c0_i32_0 = arith.constant 0 : i32
    %c0_i32_1 = arith.constant 0 : i32
    return %c0_i32, %c0_i32_0 : i32, i32
  }
  func.func @transform_4(%arg0: i32, %arg1: i32) -> (i32, i32) {
    %c0_i32 = arith.constant 0 : i32
    %c0_i32_0 = arith.constant 0 : i32
    %c0_i32_1 = arith.constant 0 : i32
    return %c0_i32, %c0_i32_0 : i32, i32
  }
  func.func @transform_5(%arg0: i32, %arg1: i32) -> (i32, i32) {
    %c0_i32 = arith.constant 0 : i32
    %c0_i32_0 = arith.constant 0 : i32
    %c0_i32_1 = arith.constant 0 : i32
    return %c0_i32, %c0_i32_0 : i32, i32
  }
  func.func @transform_6(%arg0: i32, %arg1: i32) -> (i32, i32) {
    %c0_i32 = arith.constant 0 : i32
    %c0_i32_0 = arith.constant 0 : i32
    %c0_i32_1 = arith.constant 0 : i32
    return %c0_i32, %c0_i32_0 : i32, i32
  }
  func.func @transform_7(%arg0: i32, %arg1: i32) -> (i32, i32) {
    %c0_i32 = arith.constant 0 : i32
    %c0_i32_0 = arith.constant 0 : i32
    %c0_i32_1 = arith.constant 0 : i32
    return %c0_i32, %c0_i32_0 : i32, i32
  }
  func.func @transform_8(%arg0: i32, %arg1: i32) -> (i32, i32) {
    %c0_i32 = arith.constant 0 : i32
    %c0_i32_0 = arith.constant 0 : i32
    %c0_i32_1 = arith.constant 0 : i32
    return %c0_i32, %c0_i32_0 : i32, i32
  }
  func.func @transform_9(%arg0: i32, %arg1: i32) -> (i32, i32) {
    %c0_i32 = arith.constant 0 : i32
    %c0_i32_0 = arith.constant 0 : i32
    %c0_i32_1 = arith.constant 0 : i32
    return %c0_i32, %c0_i32_0 : i32, i32
  }
  func.func @transform_10(%arg0: i32, %arg1: i32) -> (i32, i32) {
    %c0_i32 = arith.constant 0 : i32
    %c0_i32_0 = arith.constant 0 : i32
    %c0_i32_1 = arith.constant 0 : i32
    return %c0_i32, %c0_i32_0 : i32, i32
  }
  func.func @transform_11(%arg0: i32, %arg1: i32) -> (i32, i32, i32) {
    %c0_i32 = arith.constant 0 : i32
    %c0_i32_0 = arith.constant 0 : i32
    return %arg0, %arg1, %c0_i32 : i32, i32, i32
  }
}

</mosaic_0001>

<llo_original>
// kernel: tpu_custom_call.1
$region0: #{tpu_custom_call.1}
  #allocation0 [shape = 'u32[]', space=smem, size = 0x4, offset = 0x4, fixed_abs, tag = 'smem constant byte address 0x4 - core index']
  #allocation1 [shape = 'u32[144,128]{1,0:T(1,128)}', space=vmem, size = 0x12000, scoped, tag = 'internal scratch']
  #allocation2 [shape = 'bf16[4,8,8]{2,1,0:T(8,128)(2,1)}', space=vmem, size = 0x2000, scoped, tag = 'scratch operand']
  #allocation3 [shape = 'bf16[4,8,8]{2,1,0:T(8,128)(2,1)}', space=vmem, size = 0x2000, scoped, tag = 'scratch operand']
  %s0 = inlined_call_operand.vmem [shape: f32[2,8,32], index: 0, kind: input, shape index: {}]
  %s1 = inlined_call_operand.vmem [shape: f32[2,8,32], index: 1, kind: input, shape index: {}]
  %s2 = inlined_call_operand.vmem [shape: f32[1,32], index: 2, kind: input, shape index: {}]
  %s3 = inlined_call_operand.vmem [shape: bf16[32,32], index: 3, kind: input, shape index: {}]
  %s4 = inlined_call_operand.vmem [shape: bf16[32,32], index: 4, kind: input, shape index: {}]
  %s5 = inlined_call_operand.vmem [shape: bf16[32,32], index: 5, kind: input, shape index: {}]
  %s6 = inlined_call_operand.hbm [shape: bf16[32,32], index: 6, kind: input, shape index: {}]
  %s7 = inlined_call_operand.vmem [shape: f32[1,32], index: 7, kind: input, shape index: {}]
  %s8 = inlined_call_operand.hbm [shape: bf16[32,128], index: 8, kind: input, shape index: {}]
  %s9 = inlined_call_operand.hbm [shape: bf16[32,128], index: 9, kind: input, shape index: {}]
  %s10 = inlined_call_operand.vmem [shape: bf16[128,32], index: 10, kind: input, shape index: {}]
  %s11 = inlined_call_operand.hbm [shape: f32[2,8,32], index: 11, kind: output, shape index: {}]
  %s12 = sld [smem:[#allocation0]]
  $region93: #{tpu_custom_call.1} parent=0
    _
  %s14 = ssub.s32 1, %s12
  %s15 = scalar_select 0, %s14, %s12
  $region1: #{tpu_custom_call.1} parent=0
    #allocation4 [shape = 'u8[8192]{0}', space=vmem, size = 0x2000, scoped, tag = 'input window, operand 6, single buffered']
    #allocation5 [shape = 's32[2]{0}', space=sflag, size = 0x8, scoped, tag = 'scoped memory for tpu_custom_call.1']
    #allocation6 [shape = 's32[2]{0}', space=sflag, size = 0x8, scoped, tag = 'scoped memory for tpu_custom_call.1']
    #allocation7 [shape = 'u8[8192]{0}', space=vmem, size = 0x2000, scoped, tag = 'input window, operand 8, single buffered']
    #allocation8 [shape = 's32[1]{0}', space=sflag, size = 0x4, scoped, tag = 'scoped memory for tpu_custom_call.1']
    #allocation9 [shape = 'u8[8192]{0}', space=vmem, size = 0x2000, scoped, tag = 'input window, operand 9, single buffered']
    #allocation10 [shape = 'u8[8192]{0}', space=vmem, size = 0x2000, scoped, tag = 'output window, operand 0']
    %16 = vsyncpa [#allocation5], 0
    %17 = vsyncpa [#allocation8], 0
    %18 = vsyncpa [#allocation6], 0
    %s19 = scalar_lea.sflag [#allocation6], 1
    %20 = vsyncpa %s19, 0
    loop: start=0, step=1, limit=4
    $region2: #{tpu_custom_call.1} parent=1 // loop_pre_header
      _
    $region3: #{tpu_custom_call.1} parent=1 // loop_header
      %s22 = sphi 0, %s26
      %p23 = scmp.ge.s32.totalorder %s22, 4
      %s29 = sphi 0, %s41
      %s30 = sphi 0, %s37
      %s31 = sphi 0, %s29
      %s32 = sphi 0, %s30
      %s33 = sphi 0, %s31
      %s34 = sphi 0, %s32
      %s44 = sphi 0, %s46
      %s47 = sphi 0, %s44
      %s48 = sphi 0, %s47
      %s64 = sphi 0, %s48
      %s72 = sphi 0, %s74
      %s75 = sphi 0, %s72
      %s76 = sphi 0, %s75
      %s92 = sphi 0, %s76
      %s96 = sphi 0, %s96
      %s98 = sphi 0, %s96
      %s99 = sphi 0, %s98
      %s113 = sphi 0, %s99
      %s117 = sphi 0, %s117
      %s119 = sphi 0, %s117
      %s120 = sphi 0, %s119
      %s134 = sphi 0, %s120
      %s138 = sphi 0, %s138
      %s140 = sphi 0, %s138
      %s141 = sphi 0, %s140
      %s155 = sphi 0, %s141
      %s159 = sphi 0, %s159
      %s161 = sphi 0, %s159
      %s162 = sphi 0, %s161
      %s176 = sphi 0, %s162
      %s180 = sphi 0, %s180
      %s182 = sphi 0, %s180
      %s183 = sphi 0, %s182
      %s197 = sphi 0, %s183
      %s201 = sphi 0, %s201
      %s203 = sphi 0, %s201
      %s204 = sphi 0, %s203
      %s218 = sphi 0, %s204
      %s222 = sphi 0, %s222
      %s224 = sphi 0, %s222
      %s225 = sphi 0, %s224
      %s239 = sphi 0, %s225
      %s243 = sphi 0, %s243
      %s245 = sphi 0, %s243
      %s246 = sphi 0, %s245
      %s260 = sphi 0, %s246
      %s264 = sphi 0, %s264
      %s266 = sphi 0, %s264
      %s267 = sphi 0, %s266
      %s281 = sphi 0, %s267
      %s289 = sphi 0, %s291
      %s292 = sphi 0, %s289
      %s293 = sphi 0, %s292
      %s309 = sphi 0, %s293
    $region4: #{tpu_custom_call.1} parent=1 // loop_header_branch
      %25 = sbr.rel (%p23) target = $region8
    $region5: #{tpu_custom_call.1} parent=1 // loop_body
      %s27 = ssub.s32 %s22, 1
      %s28 = ssub.s32 %s22, 2
      %s35 = sadd.s32 1, %s30
      %p36 = scmp.ge.s32.totalorder %s35, 1
      %s37 = scalar_select %p36, 0, %s35
      %s38 = sadd.s32 1, %s29
      %s39 = scalar_select %p36, %s38, %s29
      %p40 = scmp.ge.s32.totalorder %s39, 2
      %s41 = scalar_select %p40, 0, %s39
      %s42 = ssub.s32 %s29, %s41
      %p43 = scmp.eq.s32.totalorder %s42, 0
      %s45 = sadd.s32 %s44, 1
      %s46 = scalar_select %p43, %s44, %s45
      %p49 = pneg %p43
      %p50 = scmp.eq.s32.totalorder %s22, 1
      %p51 = por %p49, %p50
      %p52 = scmp.ne.s32.totalorder %s44, %s47
      %p53 = scmp.eq.s32.totalorder %s22, 0
      %p54 = por %p52, %p53
      %p55 = scmp.ne.s32.totalorder %s44, %s47
      %p56 = scmp.eq.s32.totalorder %s27, 1
      %p57 = por %p55, %p56
      %p58 = scmp.ne.s32.totalorder %s47, %s48
      %p59 = scmp.eq.s32.totalorder %s27, 0
      %p60 = por %p58, %p59
      %p61 = scmp.ne.s32.totalorder %s47, %s48
      %p62 = scmp.eq.s32.totalorder %s28, 1
      %p63 = por %p61, %p62
      %p65 = scmp.ne.s32.totalorder %s48, %s64
      %p66 = scmp.eq.s32.totalorder %s28, 0
      %p67 = por %p65, %p66
      %s68 = ssub.s32 %s29, %s41
      %s69 = ssub.s32 %s30, %s37
      %s70 = sor.u32 %s68, %s69
      %p71 = scmp.eq.s32.totalorder %s70, 0
      %s73 = sadd.s32 %s72, 1
      %s74 = scalar_select %p71, %s72, %s73
      %p77 = pneg %p71
      %p78 = scmp.eq.s32.totalorder %s22, 1
      %p79 = por %p77, %p78
      %p80 = scmp.ne.s32.totalorder %s72, %s75
      %p81 = scmp.eq.s32.totalorder %s22, 0
      %p82 = por %p80, %p81
      %p83 = scmp.ne.s32.totalorder %s72, %s75
      %p84 = scmp.eq.s32.totalorder %s27, 1
      %p85 = por %p83, %p84
      %p86 = scmp.ne.s32.totalorder %s75, %s76
      %p87 = scmp.eq.s32.totalorder %s27, 0
      %p88 = por %p86, %p87
      %p89 = scmp.ne.s32.totalorder %s75, %s76
      %p90 = scmp.eq.s32.totalorder %s28, 1
      %p91 = por %p89, %p90
      %p93 = scmp.ne.s32.totalorder %s76, %s92
      %p94 = scmp.eq.s32.totalorder %s28, 0
      %p95 = por %p93, %p94
      %s97 = sadd.s32 %s96, 1
      %p100 = scmp.eq.s32.totalorder %s22, 1
      %p101 = scmp.ne.s32.totalorder %s96, %s98
      %p102 = scmp.eq.s32.totalorder %s22, 0
      %p103 = por %p101, %p102
      %p104 = scmp.ne.s32.totalorder %s96, %s98
      %p105 = scmp.eq.s32.totalorder %s27, 1
      %p106 = por %p104, %p105
      %p107 = scmp.ne.s32.totalorder %s98, %s99
      %p108 = scmp.eq.s32.totalorder %s27, 0
      %p109 = por %p107, %p108
      %p110 = scmp.ne.s32.totalorder %s98, %s99
      %p111 = scmp.eq.s32.totalorder %s28, 1
      %p112 = por %p110, %p111
      %p114 = scmp.ne.s32.totalorder %s99, %s113
      %p115 = scmp.eq.s32.totalorder %s28, 0
      %p116 = por %p114, %p115
      %s118 = sadd.s32 %s117, 1
      %p121 = scmp.eq.s32.totalorder %s22, 1
      %p122 = scmp.ne.s32.totalorder %s117, %s119
      %p123 = scmp.eq.s32.totalorder %s22, 0
      %p124 = por %p122, %p123
      %p125 = scmp.ne.s32.totalorder %s117, %s119
      %p126 = scmp.eq.s32.totalorder %s27, 1
      %p127 = por %p125, %p126
      %p128 = scmp.ne.s32.totalorder %s119, %s120
      %p129 = scmp.eq.s32.totalorder %s27, 0
      %p130 = por %p128, %p129
      %p131 = scmp.ne.s32.totalorder %s119, %s120
      %p132 = scmp.eq.s32.totalorder %s28, 1
      %p133 = por %p131, %p132
      %p135 = scmp.ne.s32.totalorder %s120, %s134
      %p136 = scmp.eq.s32.totalorder %s28, 0
      %p137 = por %p135, %p136
      %s139 = sadd.s32 %s138, 1
      %p142 = scmp.eq.s32.totalorder %s22, 1
      %p143 = scmp.ne.s32.totalorder %s138, %s140
      %p144 = scmp.eq.s32.totalorder %s22, 0
      %p145 = por %p143, %p144
      %p146 = scmp.ne.s32.totalorder %s138, %s140
      %p147 = scmp.eq.s32.totalorder %s27, 1
      %p148 = por %p146, %p147
      %p149 = scmp.ne.s32.totalorder %s140, %s141
      %p150 = scmp.eq.s32.totalorder %s27, 0
      %p151 = por %p149, %p150
      %p152 = scmp.ne.s32.totalorder %s140, %s141
      %p153 = scmp.eq.s32.totalorder %s28, 1
      %p154 = por %p152, %p153
      %p156 = scmp.ne.s32.totalorder %s141, %s155
      %p157 = scmp.eq.s32.totalorder %s28, 0
      %p158 = por %p156, %p157
      %s160 = sadd.s32 %s159, 1
      %p163 = scmp.eq.s32.totalorder %s22, 1
      %p164 = scmp.ne.s32.totalorder %s159, %s161
      %p165 = scmp.eq.s32.totalorder %s22, 0
      %p166 = por %p164, %p165
      %p167 = scmp.ne.s32.totalorder %s159, %s161
      %p168 = scmp.eq.s32.totalorder %s27, 1
      %p169 = por %p167, %p168
      %p170 = scmp.ne.s32.totalorder %s161, %s162
      %p171 = scmp.eq.s32.totalorder %s27, 0
      %p172 = por %p170, %p171
      %p173 = scmp.ne.s32.totalorder %s161, %s162
      %p174 = scmp.eq.s32.totalorder %s28, 1
      %p175 = por %p173, %p174
      %p177 = scmp.ne.s32.totalorder %s162, %s176
      %p178 = scmp.eq.s32.totalorder %s28, 0
      %p179 = por %p177, %p178
      %s181 = sadd.s32 %s180, 1
      %p184 = scmp.eq.s32.totalorder %s22, 1
      %p185 = scmp.ne.s32.totalorder %s180, %s182
      %p186 = scmp.eq.s32.totalorder %s22, 0
      %p187 = por %p185, %p186
      %p188 = scmp.ne.s32.totalorder %s180, %s182
      %p189 = scmp.eq.s32.totalorder %s27, 1
      %p190 = por %p188, %p189
      %p191 = scmp.ne.s32.totalorder %s182, %s183
      %p192 = scmp.eq.s32.totalorder %s27, 0
      %p193 = por %p191, %p192
      %p194 = scmp.ne.s32.totalorder %s182, %s183
      %p195 = scmp.eq.s32.totalorder %s28, 1
      %p196 = por %p194, %p195
      %p198 = scmp.ne.s32.totalorder %s183, %s197
      %p199 = scmp.eq.s32.totalorder %s28, 0
      %p200 = por %p198, %p199
      %s202 = sadd.s32 %s201, 1
      %p205 = scmp.eq.s32.totalorder %s22, 1
      %p206 = scmp.ne.s32.totalorder %s201, %s203
      %p207 = scmp.eq.s32.totalorder %s22, 0
      %p208 = por %p206, %p207
      %p209 = scmp.ne.s32.totalorder %s201, %s203
      %p210 = scmp.eq.s32.totalorder %s27, 1
      %p211 = por %p209, %p210
      %p212 = scmp.ne.s32.totalorder %s203, %s204
      %p213 = scmp.eq.s32.totalorder %s27, 0
      %p214 = por %p212, %p213
      %p215 = scmp.ne.s32.totalorder %s203, %s204
      %p216 = scmp.eq.s32.totalorder %s28, 1
      %p217 = por %p215, %p216
      %p219 = scmp.ne.s32.totalorder %s204, %s218
      %p220 = scmp.eq.s32.totalorder %s28, 0
      %p221 = por %p219, %p220
      %s223 = sadd.s32 %s222, 1
      %p226 = scmp.eq.s32.totalorder %s22, 1
      %p227 = scmp.ne.s32.totalorder %s222, %s224
      %p228 = scmp.eq.s32.totalorder %s22, 0
      %p229 = por %p227, %p228
      %p230 = scmp.ne.s32.totalorder %s222, %s224
      %p231 = scmp.eq.s32.totalorder %s27, 1
      %p232 = por %p230, %p231
      %p233 = scmp.ne.s32.totalorder %s224, %s225
      %p234 = scmp.eq.s32.totalorder %s27, 0
      %p235 = por %p233, %p234
      %p236 = scmp.ne.s32.totalorder %s224, %s225
      %p237 = scmp.eq.s32.totalorder %s28, 1
      %p238 = por %p236, %p237
      %p240 = scmp.ne.s32.totalorder %s225, %s239
      %p241 = scmp.eq.s32.totalorder %s28, 0
      %p242 = por %p240, %p241
      %s244 = sadd.s32 %s243, 1
      %p247 = scmp.eq.s32.totalorder %s22, 1
      %p248 = scmp.ne.s32.totalorder %s243, %s245
      %p249 = scmp.eq.s32.totalorder %s22, 0
      %p250 = por %p248, %p249
      %p251 = scmp.ne.s32.totalorder %s243, %s245
      %p252 = scmp.eq.s32.totalorder %s27, 1
      %p253 = por %p251, %p252
      %p254 = scmp.ne.s32.totalorder %s245, %s246
      %p255 = scmp.eq.s32.totalorder %s27, 0
      %p256 = por %p254, %p255
      %p257 = scmp.ne.s32.totalorder %s245, %s246
      %p258 = scmp.eq.s32.totalorder %s28, 1
      %p259 = por %p257, %p258
      %p261 = scmp.ne.s32.totalorder %s246, %s260
      %p262 = scmp.eq.s32.totalorder %s28, 0
      %p263 = por %p261, %p262
      %s265 = sadd.s32 %s264, 1
      %p268 = scmp.eq.s32.totalorder %s22, 1
      %p269 = scmp.ne.s32.totalorder %s264, %s266
      %p270 = scmp.eq.s32.totalorder %s22, 0
      %p271 = por %p269, %p270
      %p272 = scmp.ne.s32.totalorder %s264, %s266
      %p273 = scmp.eq.s32.totalorder %s27, 1
      %p274 = por %p272, %p273
      %p275 = scmp.ne.s32.totalorder %s266, %s267
      %p276 = scmp.eq.s32.totalorder %s27, 0
      %p277 = por %p275, %p276
      %p278 = scmp.ne.s32.totalorder %s266, %s267
      %p279 = scmp.eq.s32.totalorder %s28, 1
      %p280 = por %p278, %p279
      %p282 = scmp.ne.s32.totalorder %s267, %s281
      %p283 = scmp.eq.s32.totalorder %s28, 0
      %p284 = por %p282, %p283
      %s285 = ssub.s32 %s29, %s41
      %s286 = ssub.s32 %s30, %s37
      %s287 = sor.u32 %s285, %s286
      %p288 = scmp.eq.s32.totalorder %s287, 0
      %s290 = sadd.s32 %s289, 1
      %s291 = scalar_select %p288, %s289, %s290
      %p294 = pneg %p288
      %p295 = scmp.eq.s32.totalorder %s22, 1
      %p296 = por %p294, %p295
      %p297 = scmp.ne.s32.totalorder %s289, %s292
      %p298 = scmp.eq.s32.totalorder %s22, 0
      %p299 = por %p297, %p298
      %p300 = scmp.ne.s32.totalorder %s289, %s292
      %p301 = scmp.eq.s32.totalorder %s27, 1
      %p302 = por %p300, %p301
      %p303 = scmp.ne.s32.totalorder %s292, %s293
      %p304 = scmp.eq.s32.totalorder %s27, 0
      %p305 = por %p303, %p304
      %p306 = scmp.ne.s32.totalorder %s292, %s293
      %p307 = scmp.eq.s32.totalorder %s28, 1
      %p308 = por %p306, %p307
      %p310 = scmp.ne.s32.totalorder %s293, %s309
      %p311 = scmp.eq.s32.totalorder %s28, 0
      %p312 = por %p310, %p311
      %p313 = scmp.le.s32.totalorder 1, %s22
      %p314 = scmp.lt.s32.totalorder %s22, 3
      %p315 = pnand %p313, %p314
      %p316 = pneg %p315
      // Predicated region
      $region9: #{tpu_custom_call.1} parent=5 // pred_check
        _
      $region10: #{tpu_custom_call.1} parent=5 // pred_check_branch
        %318 = sbr.rel (%p315) target = $region12
      $region11: #{tpu_custom_call.1} parent=5 // pred_region
        %s319 = ssub.s32 %s22, 1
        // Predicated region
        $region13: #{tpu_custom_call.1} parent=11 // pred_check
          %p320 = pneg %p109
        $region14: #{tpu_custom_call.1} parent=11 // pred_check_branch
          %322 = sbr.rel (%p320) target = $region16
        $region15: #{tpu_custom_call.1} parent=11 // pred_region
          _
        $region16: #{tpu_custom_call.1} parent=11 // pred_fallthru
          _
        // Predicated region
        $region17: #{tpu_custom_call.1} parent=11 // pred_check
          %p323 = pneg %p130
        $region18: #{tpu_custom_call.1} parent=11 // pred_check_branch
          %325 = sbr.rel (%p323) target = $region20
        $region19: #{tpu_custom_call.1} parent=11 // pred_region
          _
        $region20: #{tpu_custom_call.1} parent=11 // pred_fallthru
          _
        // Predicated region
        $region21: #{tpu_custom_call.1} parent=11 // pred_check
          %p326 = pneg %p151
        $region22: #{tpu_custom_call.1} parent=11 // pred_check_branch
          %328 = sbr.rel (%p326) target = $region24
        $region23: #{tpu_custom_call.1} parent=11 // pred_region
          _
        $region24: #{tpu_custom_call.1} parent=11 // pred_fallthru
          _
        // Predicated region
        $region25: #{tpu_custom_call.1} parent=11 // pred_check
          %p329 = pneg %p172
        $region26: #{tpu_custom_call.1} parent=11 // pred_check_branch
          %331 = sbr.rel (%p329) target = $region28
        $region27: #{tpu_custom_call.1} parent=11 // pred_region
          _
        $region28: #{tpu_custom_call.1} parent=11 // pred_fallthru
          _
        // Predicated region
        $region29: #{tpu_custom_call.1} parent=11 // pred_check
          %p332 = pneg %p193
        $region30: #{tpu_custom_call.1} parent=11 // pred_check_branch
          %334 = sbr.rel (%p332) target = $region32
        $region31: #{tpu_custom_call.1} parent=11 // pred_region
          %s336 = ssub.s32 256, 256
          %337 = vsyncadd [#allocation5], %s336
          %s338 = sshll.u32 [#allocation4], 4
          %s339 = int_to_ptr.vmem [resolvable:$true] %s338
          %344 = dma.hbm_to_vmem [thread:$0]  %s6, 256, %s339, [#allocation5], 64, 64, 4
        $region32: #{tpu_custom_call.1} parent=11 // pred_fallthru
          _
        // Predicated region
        $region33: #{tpu_custom_call.1} parent=11 // pred_check
          %p345 = pneg %p214
        $region34: #{tpu_custom_call.1} parent=11 // pred_check_branch
          %347 = sbr.rel (%p345) target = $region36
        $region35: #{tpu_custom_call.1} parent=11 // pred_region
          _
        $region36: #{tpu_custom_call.1} parent=11 // pred_fallthru
          _
        // Predicated region
        $region37: #{tpu_custom_call.1} parent=11 // pred_check
          %p348 = pneg %p235
        $region38: #{tpu_custom_call.1} parent=11 // pred_check_branch
          %350 = sbr.rel (%p348) target = $region40
        $region39: #{tpu_custom_call.1} parent=11 // pred_region
          %s352 = ssub.s32 256, 256
          %353 = vsyncadd [#allocation8], %s352
          %s354 = sshll.u32 [#allocation7], 4
          %s355 = int_to_ptr.vmem [resolvable:$true] %s354
          %360 = dma.hbm_to_vmem [thread:$0]  %s8, 256, %s355, [#allocation8], 64, 64, 4
        $region40: #{tpu_custom_call.1} parent=11 // pred_fallthru
          _
        // Predicated region
        $region41: #{tpu_custom_call.1} parent=11 // pred_check
          %p361 = pneg %p256
        $region42: #{tpu_custom_call.1} parent=11 // pred_check_branch
          %363 = sbr.rel (%p361) target = $region44
        $region43: #{tpu_custom_call.1} parent=11 // pred_region
          %s365 = ssub.s32 256, 256
          %366 = vsyncadd [#allocation8], %s365
          %s367 = sshll.u32 [#allocation9], 4
          %s368 = int_to_ptr.vmem [resolvable:$true] %s367
          %373 = dma.hbm_to_vmem [thread:$0]  %s9, 256, %s368, [#allocation8], 64, 64, 4
        $region44: #{tpu_custom_call.1} parent=11 // pred_fallthru
          _
        // Predicated region
        $region45: #{tpu_custom_call.1} parent=11 // pred_check
          %p374 = pneg %p277
        $region46: #{tpu_custom_call.1} parent=11 // pred_check_branch
          %376 = sbr.rel (%p374) target = $region48
        $region47: #{tpu_custom_call.1} parent=11 // pred_region
          _
        $region48: #{tpu_custom_call.1} parent=11 // pred_fallthru
          _
      $region12: #{tpu_custom_call.1} parent=5 // pred_fallthru
        _
      %p377 = scmp.lt.s32.totalorder %s22, 2
      // Predicated region
      $region49: #{tpu_custom_call.1} parent=5 // pred_check
        %p378 = pneg %p377
      $region50: #{tpu_custom_call.1} parent=5 // pred_check_branch
        %380 = sbr.rel (%p378) target = $region52
      $region51: #{tpu_custom_call.1} parent=5 // pred_region
        // Predicated region
        $region53: #{tpu_custom_call.1} parent=51 // pred_check
          %p381 = pneg %p54
        $region54: #{tpu_custom_call.1} parent=51 // pred_check_branch
          %383 = sbr.rel (%p381) target = $region56
        $region55: #{tpu_custom_call.1} parent=51 // pred_region
          %p384 = scmp.lt.s32.totalorder %s29, 1
          %s385 = scalar_select %p384, %s29, 1
          %s386 = smul.addr %s385, 8
          %s387 = scalar_lea.vmem %s0, %s386
        $region56: #{tpu_custom_call.1} parent=51 // pred_fallthru
          _
        // Predicated region
        $region57: #{tpu_custom_call.1} parent=51 // pred_check
          %p388 = pneg %p82
        $region58: #{tpu_custom_call.1} parent=51 // pred_check_branch
          %390 = sbr.rel (%p388) target = $region60
        $region59: #{tpu_custom_call.1} parent=51 // pred_region
          %p391 = scmp.lt.s32.totalorder %s29, 1
          %s392 = scalar_select %p391, %s29, 1
          %p393 = scmp.lt.s32.totalorder %s30, 0
          %s394 = scalar_select %p393, %s30, 0
          %s395 = sadd.s32 %s394, %s392
          %s396 = smul.addr %s395, 8
          %s397 = scalar_lea.vmem %s1, %s396
        $region60: #{tpu_custom_call.1} parent=51 // pred_fallthru
          _
      $region52: #{tpu_custom_call.1} parent=5 // pred_fallthru
        _
      %p398 = scmp.le.s32.totalorder 1, %s22
      %p399 = scmp.lt.s32.totalorder %s22, 3
      %p400 = pnand %p398, %p399
      %p401 = pneg %p400
      // Predicated region
      $region61: #{tpu_custom_call.1} parent=5 // pred_check
        _
      $region62: #{tpu_custom_call.1} parent=5 // pred_check_branch
        %403 = sbr.rel (%p400) target = $region64
      $region63: #{tpu_custom_call.1} parent=5 // pred_region
        %s404 = ssub.s32 %s22, 1
        // Predicated region
        $region65: #{tpu_custom_call.1} parent=63 // pred_check
          %p405 = pneg %p193
        $region66: #{tpu_custom_call.1} parent=63 // pred_check_branch
          %407 = sbr.rel (%p405) target = $region68
        $region67: #{tpu_custom_call.1} parent=63 // pred_region
          %408 = dma.done [#allocation5], 256
        $region68: #{tpu_custom_call.1} parent=63 // pred_fallthru
          _
        // Predicated region
        $region69: #{tpu_custom_call.1} parent=63 // pred_check
          %p409 = pneg %p235
        $region70: #{tpu_custom_call.1} parent=63 // pred_check_branch
          %411 = sbr.rel (%p409) target = $region72
        $region71: #{tpu_custom_call.1} parent=63 // pred_region
          %412 = dma.done [#allocation8], 256
        $region72: #{tpu_custom_call.1} parent=63 // pred_fallthru
          _
        // Predicated region
        $region73: #{tpu_custom_call.1} parent=63 // pred_check
          %p413 = pneg %p256
        $region74: #{tpu_custom_call.1} parent=63 // pred_check_branch
          %415 = sbr.rel (%p413) target = $region76
        $region75: #{tpu_custom_call.1} parent=63 // pred_region
          %416 = dma.done [#allocation8], 256
        $region76: #{tpu_custom_call.1} parent=63 // pred_fallthru
          _
        %p417 = scmp.lt.s32.totalorder %s31, 1
        %s418 = scalar_select %p417, %s31, 1
        %s419 = smul.addr %s418, 8
        %s420 = scalar_lea.vmem %s0, %s419
        %p421 = pneg %p60
        %p422 = pneg %p57
        %p423 = scmp.lt.s32.totalorder %s31, 1
        %s424 = scalar_select %p423, %s31, 1
        %p425 = scmp.lt.s32.totalorder %s32, 0
        %s426 = scalar_select %p425, %s32, 0
        %s427 = sadd.s32 %s426, %s424
        %s428 = smul.addr %s427, 8
        %s429 = scalar_lea.vmem %s1, %s428
        %p430 = pneg %p88
        %p431 = pneg %p85
        %p432 = pneg %p109
        %p433 = pneg %p106
        %p434 = pneg %p130
        %p435 = pneg %p127
        %p436 = pneg %p151
        %p437 = pneg %p148
        %p438 = pneg %p172
        %p439 = pneg %p169
        %p440 = pneg %p193
        %p441 = pneg %p190
        %p442 = pneg %p214
        %p443 = pneg %p211
        %p444 = pneg %p235
        %p445 = pneg %p232
        %p446 = pneg %p256
        %p447 = pneg %p253
        %p448 = pneg %p277
        %p449 = pneg %p274
        %p450 = pneg %p305
        %p451 = pneg %p302
        %s452 = sand.u32 %s292, 1
        %s453 = scalar_lea.sflag [#allocation6], %s452
        %s454 = sand.u32 %s292, 1
        %s455 = smul.addr %s454, 8
        %s456 = scalar_lea.vmem [#allocation10], %s455
        %p457 = scmp.lt.s32.totalorder %s31, 1
        %s458 = scalar_select %p457, %s31, 1
        %s459 = smul.addr %s458, 8
        %s460 = scalar_lea.vmem %s0, %s459
        %p461 = scmp.lt.s32.totalorder %s31, 1
        %s462 = scalar_select %p461, %s31, 1
        %p463 = scmp.lt.s32.totalorder %s32, 0
        %s464 = scalar_select %p463, %s32, 0
        %s465 = sadd.s32 %s464, %s462
        %s466 = smul.addr %s465, 8
        %s467 = scalar_lea.vmem %s1, %s466
        %v469 = vld [vmem:[%s2] sm:$0x1]
        %v470 = vld [vmem:[%s7] sm:$0x1]
        %p471 = scmp.eq.s32.totalorder %s32, 0
        // Predicated region
        $region77: #{tpu_custom_call.1} parent=63 // pred_check
          %p472 = pneg %p471
        $region78: #{tpu_custom_call.1} parent=63 // pred_check_branch
          %474 = sbr.rel (%p472) target = $region80
        $region79: #{tpu_custom_call.1} parent=63 // pred_region
          %v475 = vld [vmem:[%s460] sm:$0xff]
          %v476 = vmul.f32 %v475, %v475
          %vm477 = vcmask 261120
          %v478 = vsel %vm477, %v476, 0.0
          %479 = vadd.xlane.f32.xlu0 %v478
          %v480 = vpop.xlane.xlu0 %479
          %v481 = vrcp.pop 32.0
          %v482 = vmul.f32 %v480, %v481
          %v483 = vadd.f32 %v482, 1e-06
          %v484 = vrsqrt.pop %v483
          %v485 = vmul.f32 %v475, %v484
          %v487 = vlaneseq
          %v488 = vshrl.u32 %v487, 7
          %v489 = vsub.s32 0, %v488
          %v490 = vrot.slane %v469, %v489
          %v492 = vmul.f32 %v485, %v490
          %v493 = vpack.c.bf16 %v492, %v492
          %v494 = vld [vmem:[%s4] sm:$0xf]
          %v495 = vld [vmem:[%s4 + $0x4] sm:$0xf]
          %v496 = vld [vmem:[%s4 + $0x8] sm:$0xf]
          %v497 = vld [vmem:[%s4 + $0xc] sm:$0xf]
          %v502 = vunpack.c.l.b16 %v494
          %v503 = vunpack.c.l.b16 %v495
          %v504 = vunpack.c.l.b16 %v496
          %v505 = vunpack.c.l.b16 %v497
          %v506 = vpack.c.b16 %v503, %v502
          %v507 = vpack.c.b16 %v505, %v504
          %v511 = vsel %vm477, %v493, 0
          %513 = vmatprep.subr.bf16.mxu0 0
          %514 = vmatpush1.bf16.msra.mxu0 0
          %515 = vmatprep.subr.bf16.mxu0 0
          %516 = vmatpush1.bf16.msra.mxu0 0
          %517 = vmatprep.subr.bf16.mxu0 0
          %518 = vmatpush1.bf16.msra.mxu0 0
          %519 = vmatprep.subr.bf16.mxu0 0
          %520 = vmatpush1.bf16.msra.mxu0 0
          %521 = vmatprep.subr.bf16.mxu0 0
          %522 = vmatpush1.bf16.msra.mxu0 0
          %523 = vmatprep.subr.bf16.mxu0 0
          %524 = vmatpush1.bf16.msra.mxu0 0
          %525 = vmatprep.subr.bf16.mxu0 0
          %526 = vmatpush1.bf16.msra.mxu0 %v507
          %527 = vmatprep.subr.bf16.mxu0 0
          %528 = vmatpush1.bf16.msra.mxu0 %v506
          %529 = vmatprep.subr.bf16.mxu0 0
          %530 = vmatpush2.bf16.msra.mxu0 0
          %531 = vmatprep.subr.bf16.mxu0 0
          %532 = vmatpush2.bf16.msra.mxu0 0
          %533 = vmatprep.subr.bf16.mxu0 0
          %534 = vmatpush2.bf16.msra.mxu0 0
          %535 = vmatprep.subr.bf16.mxu0 0
          %536 = vmatpush2.bf16.msra.mxu0 0
          %537 = vmatprep.subr.bf16.mxu0 0
          %538 = vmatpush2.bf16.msra.mxu0 0
          %539 = vmatprep.subr.bf16.mxu0 0
          %540 = vmatpush2.bf16.msra.mxu0 0
          %541 = vmatprep.subr.bf16.mxu0 0
          %542 = vmatpush2.bf16.msra.mxu0 0
          %543 = vmatprep.subr.bf16.mxu0 0
          %544 = vmatpush2.bf16.msra.mxu0 0
          %545 = vmatprep.mubr.bf16.mxu0 0
          %546 = vmatmul.mubr.bf16.gmra.mxu0 %v511
          %v547 = vpop.f32.mrf.mxu0
          %v548 = vadd.f32 0.0, %v547
          %v549 = vpop.f32.mrf.mxu0
          %v550 = vpop.f32.mrf.mxu0
          %v551 = vpop.f32.mrf.mxu0
          %552 = vdwg.mxu0
          %v553 = vld [vmem:[%s5] sm:$0xf]
          %v554 = vld [vmem:[%s5 + $0x4] sm:$0xf]
          %v555 = vld [vmem:[%s5 + $0x8] sm:$0xf]
          %v556 = vld [vmem:[%s5 + $0xc] sm:$0xf]
          %v561 = vunpack.c.l.b16 %v553
          %v562 = vunpack.c.l.b16 %v554
          %v563 = vunpack.c.l.b16 %v555
          %v564 = vunpack.c.l.b16 %v556
          %v565 = vpack.c.b16 %v562, %v561
          %v566 = vpack.c.b16 %v564, %v563
          %569 = vmatprep.subr.bf16.mxu0 0
          %570 = vmatpush1.bf16.msra.mxu0 0
          %571 = vmatprep.subr.bf16.mxu0 0
          %572 = vmatpush1.bf16.msra.mxu0 0
          %573 = vmatprep.subr.bf16.mxu0 0
          %574 = vmatpush1.bf16.msra.mxu0 0
          %575 = vmatprep.subr.bf16.mxu0 0
          %576 = vmatpush1.bf16.msra.mxu0 0
          %577 = vmatprep.subr.bf16.mxu0 0
          %578 = vmatpush1.bf16.msra.mxu0 0
          %579 = vmatprep.subr.bf16.mxu0 0
          %580 = vmatpush1.bf16.msra.mxu0 0
          %581 = vmatprep.subr.bf16.mxu0 0
          %582 = vmatpush1.bf16.msra.mxu0 %v566
          %583 = vmatprep.subr.bf16.mxu0 0
          %584 = vmatpush1.bf16.msra.mxu0 %v565
          %585 = vmatprep.subr.bf16.mxu0 0
          %586 = vmatpush2.bf16.msra.mxu0 0
          %587 = vmatprep.subr.bf16.mxu0 0
          %588 = vmatpush2.bf16.msra.mxu0 0
          %589 = vmatprep.subr.bf16.mxu0 0
          %590 = vmatpush2.bf16.msra.mxu0 0
          %591 = vmatprep.subr.bf16.mxu0 0
          %592 = vmatpush2.bf16.msra.mxu0 0
          %593 = vmatprep.subr.bf16.mxu0 0
          %594 = vmatpush2.bf16.msra.mxu0 0
          %595 = vmatprep.subr.bf16.mxu0 0
          %596 = vmatpush2.bf16.msra.mxu0 0
          %597 = vmatprep.subr.bf16.mxu0 0
          %598 = vmatpush2.bf16.msra.mxu0 0
          %599 = vmatprep.subr.bf16.mxu0 0
          %600 = vmatpush2.bf16.msra.mxu0 0
          %601 = vmatprep.mubr.bf16.mxu0 0
          %602 = vmatmul.mubr.bf16.gmra.mxu0 %v511
          %v603 = vpop.f32.mrf.mxu0
          %v604 = vadd.f32 0.0, %v603
          %v605 = vpop.f32.mrf.mxu0
          %v606 = vpop.f32.mrf.mxu0
          %v607 = vpop.f32.mrf.mxu0
          %608 = vdwg.mxu0
          %v609 = vpack.c.bf16 %v548, %v548
          %611 = vrot.lane.b32.xlu0 %v609, 120
          %v612 = vpop.permute.xlu0 %611
          %613 = vrot.lane.b32.xlu0 %v609, 112
          %v614 = vpop.permute.xlu0 %613
          %615 = vrot.lane.b32.xlu0 %v609, 104
          %v616 = vpop.permute.xlu0 %615
          %v618 = vunpack.c.l.s4 1983009808
          %v619 = vunpack.c.0.s8 %v618
          %v620 = vlaneseq
          %v621 = vshrl.u32 %v620, 7
          %v622 = vsub.s32 %v619, %v621
          %v623 = vrot.slane %v609, %v622
          %v626 = vunpack.c.l.s4 1983009808
          %v627 = vunpack.c.0.s8 %v626
          %v628 = vlaneseq
          %v629 = vshrl.u32 %v628, 7
          %v630 = vsub.s32 %v627, %v629
          %v631 = vrot.slane %v614, %v630
          %v632 = vcombine.low %v623, %v631
          %v633 = vcombine.high %v623, %v631
          %v635 = vunpack.c.l.s4 1934713408
          %v636 = vunpack.c.0.s8 %v635
          %v637 = vlaneseq
          %v638 = vshrl.u32 %v637, 7
          %v639 = vsub.s32 %v636, %v638
          %v640 = vrot.slane %v632, %v639
          %v642 = vunpack.c.l.s4 1934713408
          %v643 = vunpack.c.0.s8 %v642
          %v644 = vlaneseq
          %v645 = vshrl.u32 %v644, 7
          %v646 = vsub.s32 %v643, %v645
          %v647 = vrot.slane %v633, %v646
          %v648 = vcombine.high %v640, 0
          %v649 = vcombine.high %v647, 0
          %v652 = vunpack.c.l.s4 1983009808
          %v653 = vunpack.c.0.s8 %v652
          %v654 = vlaneseq
          %v655 = vshrl.u32 %v654, 7
          %v656 = vsub.s32 %v653, %v655
          %v657 = vrot.slane %v612, %v656
          %v660 = vunpack.c.l.s4 1983009808
          %v661 = vunpack.c.0.s8 %v660
          %v662 = vlaneseq
          %v663 = vshrl.u32 %v662, 7
          %v664 = vsub.s32 %v661, %v663
          %v665 = vrot.slane %v616, %v664
          %v666 = vcombine.low %v657, %v665
          %v667 = vcombine.high %v657, %v665
          %v669 = vunpack.c.l.s4 1934713408
          %v670 = vunpack.c.0.s8 %v669
          %v671 = vlaneseq
          %v672 = vshrl.u32 %v671, 7
          %v673 = vsub.s32 %v670, %v672
          %v674 = vrot.slane %v666, %v673
          %v676 = vunpack.c.l.s4 1934713408
          %v677 = vunpack.c.0.s8 %v676
          %v678 = vlaneseq
          %v679 = vshrl.u32 %v678, 7
          %v680 = vsub.s32 %v677, %v679
          %v681 = vrot.slane %v667, %v680
          %v682 = vcombine.high %v674, 0
          %v683 = vcombine.high %v681, 0
          %v686 = vpack.i.b16 %v674, %v640
          %v688 = vshrl.u32 %v640, 16
          %v689 = vshrl.u32 %v674, 16
          %v690 = vpack.i.b16 %v689, %v688
          %v694 = vpack.i.b16 %v682, %v648
          %v696 = vshrl.u32 %v648, 16
          %v697 = vshrl.u32 %v682, 16
          %v698 = vpack.i.b16 %v697, %v696
          %v702 = vpack.i.b16 %v681, %v647
          %v704 = vshrl.u32 %v647, 16
          %v705 = vshrl.u32 %v681, 16
          %v706 = vpack.i.b16 %v705, %v704
          %v710 = vpack.i.b16 %v683, %v649
          %v712 = vshrl.u32 %v649, 16
          %v713 = vshrl.u32 %v683, 16
          %v714 = vpack.i.b16 %v713, %v712
          %v716 = vcombine.low %v686, %v702
          %v718 = vunpack.c.l.s4 1983009808
          %v719 = vunpack.c.0.s8 %v718
          %v720 = vlaneseq
          %v721 = vshrl.u32 %v720, 7
          %v722 = vsub.s32 %v719, %v721
          %v723 = vrot.slane %v716, %v722
          %v724 = vcombine.low %v694, %v710
          %v726 = vunpack.c.l.s4 1983009808
          %v727 = vunpack.c.0.s8 %v726
          %v728 = vlaneseq
          %v729 = vshrl.u32 %v728, 7
          %v730 = vsub.s32 %v727, %v729
          %v731 = vrot.slane %v724, %v730
          %v732 = vcombine.low %v723, %v731
          %v734 = vunpack.c.l.s4 1934713408
          %v735 = vunpack.c.0.s8 %v734
          %v736 = vlaneseq
          %v737 = vshrl.u32 %v736, 7
          %v738 = vsub.s32 %v735, %v737
          %v739 = vrot.slane %v732, %v738
          %v740 = vcombine.high %v739, 0
          %v741 = vcombine.low %v690, %v706
          %v743 = vunpack.c.l.s4 1983009808
          %v744 = vunpack.c.0.s8 %v743
          %v745 = vlaneseq
          %v746 = vshrl.u32 %v745, 7
          %v747 = vsub.s32 %v744, %v746
          %v748 = vrot.slane %v741, %v747
          %v749 = vcombine.low %v698, %v714
          %v751 = vunpack.c.l.s4 1983009808
          %v752 = vunpack.c.0.s8 %v751
          %v753 = vlaneseq
          %v754 = vshrl.u32 %v753, 7
          %v755 = vsub.s32 %v752, %v754
          %v756 = vrot.slane %v749, %v755
          %v757 = vcombine.low %v748, %v756
          %v759 = vunpack.c.l.s4 1934713408
          %v760 = vunpack.c.0.s8 %v759
          %v761 = vlaneseq
          %v762 = vshrl.u32 %v761, 7
          %v763 = vsub.s32 %v760, %v762
          %v764 = vrot.slane %v757, %v763
          %v765 = vcombine.high %v764, 0
          %v768 = vpack.i.b16 %v764, %v739
          %v770 = vshrl.u32 %v739, 16
          %v771 = vshrl.u32 %v764, 16
          %v772 = vpack.i.b16 %v771, %v770
          %v776 = vpack.i.b16 %v765, %v740
          %v778 = vshrl.u32 %v740, 16
          %v779 = vshrl.u32 %v765, 16
          %v780 = vpack.i.b16 %v779, %v778
          %vm782 = vcmask 60416
          %783 = vst.msk [vmem:[#allocation2] sm:$0xf] %vm782, %v768
          %784 = vst.msk [vmem:[#allocation2 + $0x4] sm:$0xf] %vm782, %v772
          %785 = vst.msk [vmem:[#allocation2 + $0x8] sm:$0xf] %vm782, %v776
          %786 = vst.msk [vmem:[#allocation2 + $0xc] sm:$0xf] %vm782, %v780
          %v787 = vpack.c.bf16 %v604, %v604
          %789 = vrot.lane.b32.xlu0 %v787, 120
          %v790 = vpop.permute.xlu0 %789
          %791 = vrot.lane.b32.xlu0 %v787, 112
          %v792 = vpop.permute.xlu0 %791
          %793 = vrot.lane.b32.xlu0 %v787, 104
          %v794 = vpop.permute.xlu0 %793
          %v796 = vunpack.c.l.s4 1983009808
          %v797 = vunpack.c.0.s8 %v796
          %v798 = vlaneseq
          %v799 = vshrl.u32 %v798, 7
          %v800 = vsub.s32 %v797, %v799
          %v801 = vrot.slane %v787, %v800
          %v804 = vunpack.c.l.s4 1983009808
          %v805 = vunpack.c.0.s8 %v804
          %v806 = vlaneseq
          %v807 = vshrl.u32 %v806, 7
          %v808 = vsub.s32 %v805, %v807
          %v809 = vrot.slane %v792, %v808
          %v810 = vcombine.low %v801, %v809
          %v811 = vcombine.high %v801, %v809
          %v813 = vunpack.c.l.s4 1934713408
          %v814 = vunpack.c.0.s8 %v813
          %v815 = vlaneseq
          %v816 = vshrl.u32 %v815, 7
          %v817 = vsub.s32 %v814, %v816
          %v818 = vrot.slane %v810, %v817
          %v820 = vunpack.c.l.s4 1934713408
          %v821 = vunpack.c.0.s8 %v820
          %v822 = vlaneseq
          %v823 = vshrl.u32 %v822, 7
          %v824 = vsub.s32 %v821, %v823
          %v825 = vrot.slane %v811, %v824
          %v826 = vcombine.high %v818, 0
          %v827 = vcombine.high %v825, 0
          %v830 = vunpack.c.l.s4 1983009808
          %v831 = vunpack.c.0.s8 %v830
          %v832 = vlaneseq
          %v833 = vshrl.u32 %v832, 7
          %v834 = vsub.s32 %v831, %v833
          %v835 = vrot.slane %v790, %v834
          %v838 = vunpack.c.l.s4 1983009808
          %v839 = vunpack.c.0.s8 %v838
          %v840 = vlaneseq
          %v841 = vshrl.u32 %v840, 7
          %v842 = vsub.s32 %v839, %v841
          %v843 = vrot.slane %v794, %v842
          %v844 = vcombine.low %v835, %v843
          %v845 = vcombine.high %v835, %v843
          %v847 = vunpack.c.l.s4 1934713408
          %v848 = vunpack.c.0.s8 %v847
          %v849 = vlaneseq
          %v850 = vshrl.u32 %v849, 7
          %v851 = vsub.s32 %v848, %v850
          %v852 = vrot.slane %v844, %v851
          %v854 = vunpack.c.l.s4 1934713408
          %v855 = vunpack.c.0.s8 %v854
          %v856 = vlaneseq
          %v857 = vshrl.u32 %v856, 7
          %v858 = vsub.s32 %v855, %v857
          %v859 = vrot.slane %v845, %v858
          %v860 = vcombine.high %v852, 0
          %v861 = vcombine.high %v859, 0
          %v864 = vpack.i.b16 %v852, %v818
          %v866 = vshrl.u32 %v818, 16
          %v867 = vshrl.u32 %v852, 16
          %v868 = vpack.i.b16 %v867, %v866
          %v872 = vpack.i.b16 %v860, %v826
          %v874 = vshrl.u32 %v826, 16
          %v875 = vshrl.u32 %v860, 16
          %v876 = vpack.i.b16 %v875, %v874
          %v880 = vpack.i.b16 %v859, %v825
          %v882 = vshrl.u32 %v825, 16
          %v883 = vshrl.u32 %v859, 16
          %v884 = vpack.i.b16 %v883, %v882
          %v888 = vpack.i.b16 %v861, %v827
          %v890 = vshrl.u32 %v827, 16
          %v891 = vshrl.u32 %v861, 16
          %v892 = vpack.i.b16 %v891, %v890
          %v894 = vcombine.low %v864, %v880
          %v896 = vunpack.c.l.s4 1983009808
          %v897 = vunpack.c.0.s8 %v896
          %v898 = vlaneseq
          %v899 = vshrl.u32 %v898, 7
          %v900 = vsub.s32 %v897, %v899
          %v901 = vrot.slane %v894, %v900
          %v902 = vcombine.low %v872, %v888
          %v904 = vunpack.c.l.s4 1983009808
          %v905 = vunpack.c.0.s8 %v904
          %v906 = vlaneseq
          %v907 = vshrl.u32 %v906, 7
          %v908 = vsub.s32 %v905, %v907
          %v909 = vrot.slane %v902, %v908
          %v910 = vcombine.low %v901, %v909
          %v912 = vunpack.c.l.s4 1934713408
          %v913 = vunpack.c.0.s8 %v912
          %v914 = vlaneseq
          %v915 = vshrl.u32 %v914, 7
          %v916 = vsub.s32 %v913, %v915
          %v917 = vrot.slane %v910, %v916
          %v918 = vcombine.high %v917, 0
          %v919 = vcombine.low %v868, %v884
          %v921 = vunpack.c.l.s4 1983009808
          %v922 = vunpack.c.0.s8 %v921
          %v923 = vlaneseq
          %v924 = vshrl.u32 %v923, 7
          %v925 = vsub.s32 %v922, %v924
          %v926 = vrot.slane %v919, %v925
          %v927 = vcombine.low %v876, %v892
          %v929 = vunpack.c.l.s4 1983009808
          %v930 = vunpack.c.0.s8 %v929
          %v931 = vlaneseq
          %v932 = vshrl.u32 %v931, 7
          %v933 = vsub.s32 %v930, %v932
          %v934 = vrot.slane %v927, %v933
          %v935 = vcombine.low %v926, %v934
          %v937 = vunpack.c.l.s4 1934713408
          %v938 = vunpack.c.0.s8 %v937
          %v939 = vlaneseq
          %v940 = vshrl.u32 %v939, 7
          %v941 = vsub.s32 %v938, %v940
          %v942 = vrot.slane %v935, %v941
          %v943 = vcombine.high %v942, 0
          %v946 = vpack.i.b16 %v942, %v917
          %v948 = vshrl.u32 %v917, 16
          %v949 = vshrl.u32 %v942, 16
          %v950 = vpack.i.b16 %v949, %v948
          %v954 = vpack.i.b16 %v943, %v918
          %v956 = vshrl.u32 %v918, 16
          %v957 = vshrl.u32 %v943, 16
          %v958 = vpack.i.b16 %v957, %v956
          %960 = vst.msk [vmem:[#allocation3] sm:$0xf] %vm782, %v946
          %961 = vst.msk [vmem:[#allocation3 + $0x4] sm:$0xf] %vm782, %v950
          %962 = vst.msk [vmem:[#allocation3 + $0x8] sm:$0xf] %vm782, %v954
          %963 = vst.msk [vmem:[#allocation3 + $0xc] sm:$0xf] %vm782, %v958
        $region80: #{tpu_custom_call.1} parent=63 // pred_fallthru
          _
        %v964 = vld [vmem:[%s467] sm:$0xff]
        %v965 = vmul.f32 %v964, %v964
        %vm966 = vcmask 261120
        %v967 = vsel %vm966, %v965, 0.0
        %968 = vadd.xlane.f32.xlu0 %v967
        %v969 = vpop.xlane.xlu0 %968
        %v970 = vrcp.pop 32.0
        %v971 = vmul.f32 %v969, %v970
        %v972 = vadd.f32 %v971, 1e-06
        %v973 = vrsqrt.pop %v972
        %v974 = vmul.f32 %v964, %v973
        %v976 = vlaneseq
        %v977 = vshrl.u32 %v976, 7
        %v978 = vsub.s32 0, %v977
        %v979 = vrot.slane %v469, %v978
        %v981 = vmul.f32 %v974, %v979
        %v982 = vpack.c.bf16 %v981, %v981
        %v983 = vld [vmem:[%s3] sm:$0xf]
        %v984 = vld [vmem:[%s3 + $0x4] sm:$0xf]
        %v985 = vld [vmem:[%s3 + $0x8] sm:$0xf]
        %v986 = vld [vmem:[%s3 + $0xc] sm:$0xf]
        %v991 = vunpack.c.l.b16 %v983
        %v992 = vunpack.c.l.b16 %v984
        %v993 = vunpack.c.l.b16 %v985
        %v994 = vunpack.c.l.b16 %v986
        %v995 = vpack.c.b16 %v992, %v991
        %v996 = vpack.c.b16 %v994, %v993
        %v1000 = vsel %vm966, %v982, 0
        %1002 = vmatprep.subr.bf16.mxu0 0
        %1003 = vmatpush1.bf16.msra.mxu0 0
        %1004 = vmatprep.subr.bf16.mxu0 0
        %1005 = vmatpush1.bf16.msra.mxu0 0
        %1006 = vmatprep.subr.bf16.mxu0 0
        %1007 = vmatpush1.bf16.msra.mxu0 0
        %1008 = vmatprep.subr.bf16.mxu0 0
        %1009 = vmatpush1.bf16.msra.mxu0 0
        %1010 = vmatprep.subr.bf16.mxu0 0
        %1011 = vmatpush1.bf16.msra.mxu0 0
        %1012 = vmatprep.subr.bf16.mxu0 0
        %1013 = vmatpush1.bf16.msra.mxu0 0
        %1014 = vmatprep.subr.bf16.mxu0 0
        %1015 = vmatpush1.bf16.msra.mxu0 %v996
        %1016 = vmatprep.subr.bf16.mxu0 0
        %1017 = vmatpush1.bf16.msra.mxu0 %v995
        %1018 = vmatprep.subr.bf16.mxu0 0
        %1019 = vmatpush2.bf16.msra.mxu0 0
        %1020 = vmatprep.subr.bf16.mxu0 0
        %1021 = vmatpush2.bf16.msra.mxu0 0
        %1022 = vmatprep.subr.bf16.mxu0 0
        %1023 = vmatpush2.bf16.msra.mxu0 0
        %1024 = vmatprep.subr.bf16.mxu0 0
        %1025 = vmatpush2.bf16.msra.mxu0 0
        %1026 = vmatprep.subr.bf16.mxu0 0
        %1027 = vmatpush2.bf16.msra.mxu0 0
        %1028 = vmatprep.subr.bf16.mxu0 0
        %1029 = vmatpush2.bf16.msra.mxu0 0
        %1030 = vmatprep.subr.bf16.mxu0 0
        %1031 = vmatpush2.bf16.msra.mxu0 0
        %1032 = vmatprep.subr.bf16.mxu0 0
        %1033 = vmatpush2.bf16.msra.mxu0 0
        %1034 = vmatprep.mubr.bf16.mxu0 0
        %1035 = vmatmul.mubr.bf16.gmra.mxu0 %v1000
        %v1036 = vpop.f32.mrf.mxu0
        %v1037 = vadd.f32 0.0, %v1036
        %v1038 = vpop.f32.mrf.mxu0
        %v1039 = vpop.f32.mrf.mxu0
        %v1040 = vpop.f32.mrf.mxu0
        %1041 = vdwg.mxu0
        %v1042 = vpack.c.bf16 %v1037, %v1037
        %1044 = vrot.lane.b32.xlu0 %v1042, 120
        %v1045 = vpop.permute.xlu0 %1044
        %1046 = vrot.lane.b32.xlu0 %v1042, 112
        %v1047 = vpop.permute.xlu0 %1046
        %1048 = vrot.lane.b32.xlu0 %v1042, 104
        %v1049 = vpop.permute.xlu0 %1048
        %v1051 = vunpack.c.l.s4 1983009808
        %v1052 = vunpack.c.0.s8 %v1051
        %v1053 = vlaneseq
        %v1054 = vshrl.u32 %v1053, 7
        %v1055 = vsub.s32 %v1052, %v1054
        %v1056 = vrot.slane %v1042, %v1055
        %v1059 = vunpack.c.l.s4 1983009808
        %v1060 = vunpack.c.0.s8 %v1059
        %v1061 = vlaneseq
        %v1062 = vshrl.u32 %v1061, 7
        %v1063 = vsub.s32 %v1060, %v1062
        %v1064 = vrot.slane %v1047, %v1063
        %v1065 = vcombine.low %v1056, %v1064
        %v1066 = vcombine.high %v1056, %v1064
        %v1068 = vunpack.c.l.s4 1934713408
        %v1069 = vunpack.c.0.s8 %v1068
        %v1070 = vlaneseq
        %v1071 = vshrl.u32 %v1070, 7
        %v1072 = vsub.s32 %v1069, %v1071
        %v1073 = vrot.slane %v1065, %v1072
        %v1075 = vunpack.c.l.s4 1934713408
        %v1076 = vunpack.c.0.s8 %v1075
        %v1077 = vlaneseq
        %v1078 = vshrl.u32 %v1077, 7
        %v1079 = vsub.s32 %v1076, %v1078
        %v1080 = vrot.slane %v1066, %v1079
        %v1081 = vcombine.high %v1073, 0
        %v1082 = vcombine.high %v1080, 0
        %v1085 = vunpack.c.l.s4 1983009808
        %v1086 = vunpack.c.0.s8 %v1085
        %v1087 = vlaneseq
        %v1088 = vshrl.u32 %v1087, 7
        %v1089 = vsub.s32 %v1086, %v1088
        %v1090 = vrot.slane %v1045, %v1089
        %v1093 = vunpack.c.l.s4 1983009808
        %v1094 = vunpack.c.0.s8 %v1093
        %v1095 = vlaneseq
        %v1096 = vshrl.u32 %v1095, 7
        %v1097 = vsub.s32 %v1094, %v1096
        %v1098 = vrot.slane %v1049, %v1097
        %v1099 = vcombine.low %v1090, %v1098
        %v1100 = vcombine.high %v1090, %v1098
        %v1102 = vunpack.c.l.s4 1934713408
        %v1103 = vunpack.c.0.s8 %v1102
        %v1104 = vlaneseq
        %v1105 = vshrl.u32 %v1104, 7
        %v1106 = vsub.s32 %v1103, %v1105
        %v1107 = vrot.slane %v1099, %v1106
        %v1109 = vunpack.c.l.s4 1934713408
        %v1110 = vunpack.c.0.s8 %v1109
        %v1111 = vlaneseq
        %v1112 = vshrl.u32 %v1111, 7
        %v1113 = vsub.s32 %v1110, %v1112
        %v1114 = vrot.slane %v1100, %v1113
        %v1115 = vcombine.high %v1107, 0
        %v1116 = vcombine.high %v1114, 0
        %v1119 = vpack.i.b16 %v1107, %v1073
        %v1121 = vshrl.u32 %v1073, 16
        %v1122 = vshrl.u32 %v1107, 16
        %v1123 = vpack.i.b16 %v1122, %v1121
        %v1127 = vpack.i.b16 %v1115, %v1081
        %v1129 = vshrl.u32 %v1081, 16
        %v1130 = vshrl.u32 %v1115, 16
        %v1131 = vpack.i.b16 %v1130, %v1129
        %v1135 = vpack.i.b16 %v1114, %v1080
        %v1137 = vshrl.u32 %v1080, 16
        %v1138 = vshrl.u32 %v1114, 16
        %v1139 = vpack.i.b16 %v1138, %v1137
        %v1143 = vpack.i.b16 %v1116, %v1082
        %v1145 = vshrl.u32 %v1082, 16
        %v1146 = vshrl.u32 %v1116, 16
        %v1147 = vpack.i.b16 %v1146, %v1145
        %v1149 = vcombine.low %v1119, %v1135
        %v1151 = vunpack.c.l.s4 1983009808
        %v1152 = vunpack.c.0.s8 %v1151
        %v1153 = vlaneseq
        %v1154 = vshrl.u32 %v1153, 7
        %v1155 = vsub.s32 %v1152, %v1154
        %v1156 = vrot.slane %v1149, %v1155
        %v1157 = vcombine.low %v1127, %v1143
        %v1159 = vunpack.c.l.s4 1983009808
        %v1160 = vunpack.c.0.s8 %v1159
        %v1161 = vlaneseq
        %v1162 = vshrl.u32 %v1161, 7
        %v1163 = vsub.s32 %v1160, %v1162
        %v1164 = vrot.slane %v1157, %v1163
        %v1165 = vcombine.low %v1156, %v1164
        %v1167 = vunpack.c.l.s4 1934713408
        %v1168 = vunpack.c.0.s8 %v1167
        %v1169 = vlaneseq
        %v1170 = vshrl.u32 %v1169, 7
        %v1171 = vsub.s32 %v1168, %v1170
        %v1172 = vrot.slane %v1165, %v1171
        %v1173 = vcombine.high %v1172, 0
        %v1174 = vcombine.low %v1123, %v1139
        %v1176 = vunpack.c.l.s4 1983009808
        %v1177 = vunpack.c.0.s8 %v1176
        %v1178 = vlaneseq
        %v1179 = vshrl.u32 %v1178, 7
        %v1180 = vsub.s32 %v1177, %v1179
        %v1181 = vrot.slane %v1174, %v1180
        %v1182 = vcombine.low %v1131, %v1147
        %v1184 = vunpack.c.l.s4 1983009808
        %v1185 = vunpack.c.0.s8 %v1184
        %v1186 = vlaneseq
        %v1187 = vshrl.u32 %v1186, 7
        %v1188 = vsub.s32 %v1185, %v1187
        %v1189 = vrot.slane %v1182, %v1188
        %v1190 = vcombine.low %v1181, %v1189
        %v1192 = vunpack.c.l.s4 1934713408
        %v1193 = vunpack.c.0.s8 %v1192
        %v1194 = vlaneseq
        %v1195 = vshrl.u32 %v1194, 7
        %v1196 = vsub.s32 %v1193, %v1195
        %v1197 = vrot.slane %v1190, %v1196
        %v1198 = vcombine.high %v1197, 0
        %v1201 = vpack.i.b16 %v1197, %v1172
        %v1202 = vshrl.u32 %v1172, 16
        %v1203 = vshrl.u32 %v1197, 16
        %v1204 = vpack.i.b16 %v1203, %v1202
        %v1207 = vpack.i.b16 %v1198, %v1173
        %v1208 = vshrl.u32 %v1173, 16
        %v1209 = vshrl.u32 %v1198, 16
        %v1210 = vpack.i.b16 %v1209, %v1208
        %v1211 = vld [vmem:[#allocation2] sm:$0xf]
        %v1212 = vld [vmem:[#allocation2 + $0x4] sm:$0xf]
        %v1213 = vld [vmem:[#allocation2 + $0x8] sm:$0xf]
        %v1214 = vld [vmem:[#allocation2 + $0xc] sm:$0xf]
        %v1215 = vld [vmem:[#allocation3] sm:$0xf]
        %v1216 = vld [vmem:[#allocation3 + $0x4] sm:$0xf]
        %v1217 = vld [vmem:[#allocation3 + $0x8] sm:$0xf]
        %v1218 = vld [vmem:[#allocation3 + $0xc] sm:$0xf]
        %vm1219 = vcmask 64512
        %v1221 = vsel %vm1219, %v1201, 0
        %v1224 = vsel %vm1219, %v1211, 0
        %1226 = vmatprep.subr.bf16.mxu0 0
        %1227 = vmatpush1.bf16.xpose.msra.mxu0 0
        %1228 = vmatprep.subr.bf16.mxu0 0
        %1229 = vmatpush1.bf16.xpose.msra.mxu0 0
        %1230 = vmatprep.subr.bf16.mxu0 0
        %1231 = vmatpush1.bf16.xpose.msra.mxu0 0
        %1232 = vmatprep.subr.bf16.mxu0 0
        %1233 = vmatpush1.bf16.xpose.msra.mxu0 0
        %1234 = vmatprep.subr.bf16.mxu0 0
        %1235 = vmatpush1.bf16.xpose.msra.mxu0 0
        %1236 = vmatprep.subr.bf16.mxu0 0
        %1237 = vmatpush1.bf16.xpose.msra.mxu0 0
        %1238 = vmatprep.subr.bf16.mxu0 0
        %1239 = vmatpush1.bf16.xpose.msra.mxu0 0
        %1240 = vmatprep.subr.bf16.mxu0 0
        %1241 = vmatpush1.bf16.xpose.msra.mxu0 %v1224
        %1242 = vmatprep.subr.bf16.mxu0 0
        %1243 = vmatpush2.bf16.xpose.msra.mxu0 0
        %1244 = vmatprep.subr.bf16.mxu0 0
        %1245 = vmatpush2.bf16.xpose.msra.mxu0 0
        %1246 = vmatprep.subr.bf16.mxu0 0
        %1247 = vmatpush2.bf16.xpose.msra.mxu0 0
        %1248 = vmatprep.subr.bf16.mxu0 0
        %1249 = vmatpush2.bf16.xpose.msra.mxu0 0
        %1250 = vmatprep.subr.bf16.mxu0 0
        %1251 = vmatpush2.bf16.xpose.msra.mxu0 0
        %1252 = vmatprep.subr.bf16.mxu0 0
        %1253 = vmatpush2.bf16.xpose.msra.mxu0 0
        %1254 = vmatprep.subr.bf16.mxu0 0
        %1255 = vmatpush2.bf16.xpose.msra.mxu0 0
        %1256 = vmatprep.subr.bf16.mxu0 0
        %1257 = vmatpush2.bf16.xpose.msra.mxu0 0
        %1258 = vmatprep.mubr.bf16.mxu0 0
        %1259 = vmatmul.mubr.bf16.gmra.mxu0 %v1221
        %v1260 = vpop.f32.mrf.mxu0
        %v1261 = vadd.f32 0.0, %v1260
        %v1262 = vpop.f32.mrf.mxu0
        %v1263 = vpop.f32.mrf.mxu0
        %v1264 = vpop.f32.mrf.mxu0
        %1265 = vdwg.mxu0
        %v1267 = vsel %vm1219, %v1204, 0
        %v1270 = vsel %vm1219, %v1212, 0
        %1272 = vmatprep.subr.bf16.mxu0 0
        %1273 = vmatpush1.bf16.xpose.msra.mxu0 0
        %1274 = vmatprep.subr.bf16.mxu0 0
        %1275 = vmatpush1.bf16.xpose.msra.mxu0 0
        %1276 = vmatprep.subr.bf16.mxu0 0
        %1277 = vmatpush1.bf16.xpose.msra.mxu0 0
        %1278 = vmatprep.subr.bf16.mxu0 0
        %1279 = vmatpush1.bf16.xpose.msra.mxu0 0
        %1280 = vmatprep.subr.bf16.mxu0 0
        %1281 = vmatpush1.bf16.xpose.msra.mxu0 0
        %1282 = vmatprep.subr.bf16.mxu0 0
        %1283 = vmatpush1.bf16.xpose.msra.mxu0 0
        %1284 = vmatprep.subr.bf16.mxu0 0
        %1285 = vmatpush1.bf16.xpose.msra.mxu0 0
        %1286 = vmatprep.subr.bf16.mxu0 0
        %1287 = vmatpush1.bf16.xpose.msra.mxu0 %v1270
        %1288 = vmatprep.subr.bf16.mxu0 0
        %1289 = vmatpush2.bf16.xpose.msra.mxu0 0
        %1290 = vmatprep.subr.bf16.mxu0 0
        %1291 = vmatpush2.bf16.xpose.msra.mxu0 0
        %1292 = vmatprep.subr.bf16.mxu0 0
        %1293 = vmatpush2.bf16.xpose.msra.mxu0 0
        %1294 = vmatprep.subr.bf16.mxu0 0
        %1295 = vmatpush2.bf16.xpose.msra.mxu0 0
        %1296 = vmatprep.subr.bf16.mxu0 0
        %1297 = vmatpush2.bf16.xpose.msra.mxu0 0
        %1298 = vmatprep.subr.bf16.mxu0 0
        %1299 = vmatpush2.bf16.xpose.msra.mxu0 0
        %1300 = vmatprep.subr.bf16.mxu0 0
        %1301 = vmatpush2.bf16.xpose.msra.mxu0 0
        %1302 = vmatprep.subr.bf16.mxu0 0
        %1303 = vmatpush2.bf16.xpose.msra.mxu0 0
        %1304 = vmatprep.mubr.bf16.mxu0 0
        %1305 = vmatmul.mubr.bf16.gmra.mxu0 %v1267
        %v1306 = vpop.f32.mrf.mxu0
        %v1307 = vadd.f32 0.0, %v1306
        %v1308 = vpop.f32.mrf.mxu0
        %v1309 = vpop.f32.mrf.mxu0
        %v1310 = vpop.f32.mrf.mxu0
        %1311 = vdwg.mxu0
        %v1313 = vsel %vm1219, %v1207, 0
        %v1316 = vsel %vm1219, %v1213, 0
        %1318 = vmatprep.subr.bf16.mxu0 0
        %1319 = vmatpush1.bf16.xpose.msra.mxu0 0
        %1320 = vmatprep.subr.bf16.mxu0 0
        %1321 = vmatpush1.bf16.xpose.msra.mxu0 0
        %1322 = vmatprep.subr.bf16.mxu0 0
        %1323 = vmatpush1.bf16.xpose.msra.mxu0 0
        %1324 = vmatprep.subr.bf16.mxu0 0
        %1325 = vmatpush1.bf16.xpose.msra.mxu0 0
        %1326 = vmatprep.subr.bf16.mxu0 0
        %1327 = vmatpush1.bf16.xpose.msra.mxu0 0
        %1328 = vmatprep.subr.bf16.mxu0 0
        %1329 = vmatpush1.bf16.xpose.msra.mxu0 0
        %1330 = vmatprep.subr.bf16.mxu0 0
        %1331 = vmatpush1.bf16.xpose.msra.mxu0 0
        %1332 = vmatprep.subr.bf16.mxu0 0
        %1333 = vmatpush1.bf16.xpose.msra.mxu0 %v1316
        %1334 = vmatprep.subr.bf16.mxu0 0
        %1335 = vmatpush2.bf16.xpose.msra.mxu0 0
        %1336 = vmatprep.subr.bf16.mxu0 0
        %1337 = vmatpush2.bf16.xpose.msra.mxu0 0
        %1338 = vmatprep.subr.bf16.mxu0 0
        %1339 = vmatpush2.bf16.xpose.msra.mxu0 0
        %1340 = vmatprep.subr.bf16.mxu0 0
        %1341 = vmatpush2.bf16.xpose.msra.mxu0 0
        %1342 = vmatprep.subr.bf16.mxu0 0
        %1343 = vmatpush2.bf16.xpose.msra.mxu0 0
        %1344 = vmatprep.subr.bf16.mxu0 0
        %1345 = vmatpush2.bf16.xpose.msra.mxu0 0
        %1346 = vmatprep.subr.bf16.mxu0 0
        %1347 = vmatpush2.bf16.xpose.msra.mxu0 0
        %1348 = vmatprep.subr.bf16.mxu0 0
        %1349 = vmatpush2.bf16.xpose.msra.mxu0 0
        %1350 = vmatprep.mubr.bf16.mxu0 0
        %1351 = vmatmul.mubr.bf16.gmra.mxu0 %v1313
        %v1352 = vpop.f32.mrf.mxu0
        %v1353 = vadd.f32 0.0, %v1352
        %v1354 = vpop.f32.mrf.mxu0
        %v1355 = vpop.f32.mrf.mxu0
        %v1356 = vpop.f32.mrf.mxu0
        %1357 = vdwg.mxu0
        %v1359 = vsel %vm1219, %v1210, 0
        %v1362 = vsel %vm1219, %v1214, 0
        %1364 = vmatprep.subr.bf16.mxu0 0
        %1365 = vmatpush1.bf16.xpose.msra.mxu0 0
        %1366 = vmatprep.subr.bf16.mxu0 0
        %1367 = vmatpush1.bf16.xpose.msra.mxu0 0
        %1368 = vmatprep.subr.bf16.mxu0 0
        %1369 = vmatpush1.bf16.xpose.msra.mxu0 0
        %1370 = vmatprep.subr.bf16.mxu0 0
        %1371 = vmatpush1.bf16.xpose.msra.mxu0 0
        %1372 = vmatprep.subr.bf16.mxu0 0
        %1373 = vmatpush1.bf16.xpose.msra.mxu0 0
        %1374 = vmatprep.subr.bf16.mxu0 0
        %1375 = vmatpush1.bf16.xpose.msra.mxu0 0
        %1376 = vmatprep.subr.bf16.mxu0 0
        %1377 = vmatpush1.bf16.xpose.msra.mxu0 0
        %1378 = vmatprep.subr.bf16.mxu0 0
        %1379 = vmatpush1.bf16.xpose.msra.mxu0 %v1362
        %1380 = vmatprep.subr.bf16.mxu0 0
        %1381 = vmatpush2.bf16.xpose.msra.mxu0 0
        %1382 = vmatprep.subr.bf16.mxu0 0
        %1383 = vmatpush2.bf16.xpose.msra.mxu0 0
        %1384 = vmatprep.subr.bf16.mxu0 0
        %1385 = vmatpush2.bf16.xpose.msra.mxu0 0
        %1386 = vmatprep.subr.bf16.mxu0 0
        %1387 = vmatpush2.bf16.xpose.msra.mxu0 0
        %1388 = vmatprep.subr.bf16.mxu0 0
        %1389 = vmatpush2.bf16.xpose.msra.mxu0 0
        %1390 = vmatprep.subr.bf16.mxu0 0
        %1391 = vmatpush2.bf16.xpose.msra.mxu0 0
        %1392 = vmatprep.subr.bf16.mxu0 0
        %1393 = vmatpush2.bf16.xpose.msra.mxu0 0
        %1394 = vmatprep.subr.bf16.mxu0 0
        %1395 = vmatpush2.bf16.xpose.msra.mxu0 0
        %1396 = vmatprep.mubr.bf16.mxu0 0
        %1397 = vmatmul.mubr.bf16.gmra.mxu0 %v1359
        %v1398 = vpop.f32.mrf.mxu0
        %v1399 = vadd.f32 0.0, %v1398
        %v1400 = vpop.f32.mrf.mxu0
        %v1401 = vpop.f32.mrf.mxu0
        %v1402 = vpop.f32.mrf.mxu0
        %1403 = vdwg.mxu0
        %v1404 = vsel %vm1219, %v1261, -inf
        %1405 = vmax.xlane.f32.xlu0 %v1404
        %v1406 = vpop.xlane.xlu0 %1405
        %v1407 = vsel %vm1219, %v1307, -inf
        %1408 = vmax.xlane.f32.xlu0 %v1407
        %v1409 = vpop.xlane.xlu0 %1408
        %v1410 = vsel %vm1219, %v1353, -inf
        %1411 = vmax.xlane.f32.xlu0 %v1410
        %v1412 = vpop.xlane.xlu0 %1411
        %v1413 = vsel %vm1219, %v1399, -inf
        %1414 = vmax.xlane.f32.xlu0 %v1413
        %v1415 = vpop.xlane.xlu0 %1414
        %v1416 = vsub.f32 %v1261, %v1406
        %v1417 = vsub.f32 %v1307, %v1409
        %v1418 = vsub.f32 %v1353, %v1412
        %v1419 = vsub.f32 %v1399, %v1415
        %v1420 = vmul.f32 %v1416, 1.442695
        %v1421 = vpow.pop %v1420
        %v1422 = vmul.f32 %v1417, 1.442695
        %v1423 = vpow.pop %v1422
        %v1424 = vmul.f32 %v1418, 1.442695
        %v1425 = vpow.pop %v1424
        %v1426 = vmul.f32 %v1419, 1.442695
        %v1427 = vpow.pop %v1426
        %v1428 = vsel %vm1219, %v1421, 0.0
        %1429 = vadd.xlane.f32.xlu0 %v1428
        %v1430 = vpop.xlane.xlu0 %1429
        %v1431 = vsel %vm1219, %v1423, 0.0
        %1432 = vadd.xlane.f32.xlu0 %v1431
        %v1433 = vpop.xlane.xlu0 %1432
        %v1434 = vsel %vm1219, %v1425, 0.0
        %1435 = vadd.xlane.f32.xlu0 %v1434
        %v1436 = vpop.xlane.xlu0 %1435
        %v1437 = vsel %vm1219, %v1427, 0.0
        %1438 = vadd.xlane.f32.xlu0 %v1437
        %v1439 = vpop.xlane.xlu0 %1438
        %v1440 = vpack.c.bf16 %v1421, %v1421
        %v1441 = vpack.c.bf16 %v1423, %v1423
        %v1442 = vpack.c.bf16 %v1425, %v1425
        %v1443 = vpack.c.bf16 %v1427, %v1427
        %v1445 = vsel %vm1219, %v1440, 0
        %vm1447 = vcmask 1043456
        %v1449 = vsel %vm1447, %v1215, 0
        %1451 = vmatprep.subr.bf16.mxu0 0
        %1452 = vmatpush1.bf16.msra.mxu0 0
        %1453 = vmatprep.subr.bf16.mxu0 0
        %1454 = vmatpush1.bf16.msra.mxu0 0
        %1455 = vmatprep.subr.bf16.mxu0 0
        %1456 = vmatpush1.bf16.msra.mxu0 0
        %1457 = vmatprep.subr.bf16.mxu0 0
        %1458 = vmatpush1.bf16.msra.mxu0 0
        %1459 = vmatprep.subr.bf16.mxu0 0
        %1460 = vmatpush1.bf16.msra.mxu0 0
        %1461 = vmatprep.subr.bf16.mxu0 0
        %1462 = vmatpush1.bf16.msra.mxu0 0
        %1463 = vmatprep.subr.bf16.mxu0 0
        %1464 = vmatpush1.bf16.msra.mxu0 0
        %1465 = vmatprep.subr.bf16.mxu0 0
        %1466 = vmatpush1.bf16.msra.mxu0 %v1449
        %1467 = vmatprep.subr.bf16.mxu0 0
        %1468 = vmatpush2.bf16.msra.mxu0 0
        %1469 = vmatprep.subr.bf16.mxu0 0
        %1470 = vmatpush2.bf16.msra.mxu0 0
        %1471 = vmatprep.subr.bf16.mxu0 0
        %1472 = vmatpush2.bf16.msra.mxu0 0
        %1473 = vmatprep.subr.bf16.mxu0 0
        %1474 = vmatpush2.bf16.msra.mxu0 0
        %1475 = vmatprep.subr.bf16.mxu0 0
        %1476 = vmatpush2.bf16.msra.mxu0 0
        %1477 = vmatprep.subr.bf16.mxu0 0
        %1478 = vmatpush2.bf16.msra.mxu0 0
        %1479 = vmatprep.subr.bf16.mxu0 0
        %1480 = vmatpush2.bf16.msra.mxu0 0
        %1481 = vmatprep.subr.bf16.mxu0 0
        %1482 = vmatpush2.bf16.msra.mxu0 0
        %1483 = vmatprep.mubr.bf16.mxu0 0
        %1484 = vmatmul.mubr.bf16.gmra.mxu0 %v1445
        %v1485 = vpop.f32.mrf.mxu0
        %v1486 = vadd.f32 0.0, %v1485
        %v1487 = vpop.f32.mrf.mxu0
        %v1488 = vpop.f32.mrf.mxu0
        %v1489 = vpop.f32.mrf.mxu0
        %1490 = vdwg.mxu0
        %v1492 = vsel %vm1219, %v1441, 0
        %v1495 = vsel %vm1447, %v1216, 0
        %1497 = vmatprep.subr.bf16.mxu0 0
        %1498 = vmatpush1.bf16.msra.mxu0 0
        %1499 = vmatprep.subr.bf16.mxu0 0
        %1500 = vmatpush1.bf16.msra.mxu0 0
        %1501 = vmatprep.subr.bf16.mxu0 0
        %1502 = vmatpush1.bf16.msra.mxu0 0
        %1503 = vmatprep.subr.bf16.mxu0 0
        %1504 = vmatpush1.bf16.msra.mxu0 0
        %1505 = vmatprep.subr.bf16.mxu0 0
        %1506 = vmatpush1.bf16.msra.mxu0 0
        %1507 = vmatprep.subr.bf16.mxu0 0
        %1508 = vmatpush1.bf16.msra.mxu0 0
        %1509 = vmatprep.subr.bf16.mxu0 0
        %1510 = vmatpush1.bf16.msra.mxu0 0
        %1511 = vmatprep.subr.bf16.mxu0 0
        %1512 = vmatpush1.bf16.msra.mxu0 %v1495
        %1513 = vmatprep.subr.bf16.mxu0 0
        %1514 = vmatpush2.bf16.msra.mxu0 0
        %1515 = vmatprep.subr.bf16.mxu0 0
        %1516 = vmatpush2.bf16.msra.mxu0 0
        %1517 = vmatprep.subr.bf16.mxu0 0
        %1518 = vmatpush2.bf16.msra.mxu0 0
        %1519 = vmatprep.subr.bf16.mxu0 0
        %1520 = vmatpush2.bf16.msra.mxu0 0
        %1521 = vmatprep.subr.bf16.mxu0 0
        %1522 = vmatpush2.bf16.msra.mxu0 0
        %1523 = vmatprep.subr.bf16.mxu0 0
        %1524 = vmatpush2.bf16.msra.mxu0 0
        %1525 = vmatprep.subr.bf16.mxu0 0
        %1526 = vmatpush2.bf16.msra.mxu0 0
        %1527 = vmatprep.subr.bf16.mxu0 0
        %1528 = vmatpush2.bf16.msra.mxu0 0
        %1529 = vmatprep.mubr.bf16.mxu0 0
        %1530 = vmatmul.mubr.bf16.gmra.mxu0 %v1492
        %v1531 = vpop.f32.mrf.mxu0
        %v1532 = vadd.f32 0.0, %v1531
        %v1533 = vpop.f32.mrf.mxu0
        %v1534 = vpop.f32.mrf.mxu0
        %v1535 = vpop.f32.mrf.mxu0
        %1536 = vdwg.mxu0
        %v1538 = vsel %vm1219, %v1442, 0
        %v1541 = vsel %vm1447, %v1217, 0
        %1543 = vmatprep.subr.bf16.mxu0 0
        %1544 = vmatpush1.bf16.msra.mxu0 0
        %1545 = vmatprep.subr.bf16.mxu0 0
        %1546 = vmatpush1.bf16.msra.mxu0 0
        %1547 = vmatprep.subr.bf16.mxu0 0
        %1548 = vmatpush1.bf16.msra.mxu0 0
        %1549 = vmatprep.subr.bf16.mxu0 0
        %1550 = vmatpush1.bf16.msra.mxu0 0
        %1551 = vmatprep.subr.bf16.mxu0 0
        %1552 = vmatpush1.bf16.msra.mxu0 0
        %1553 = vmatprep.subr.bf16.mxu0 0
        %1554 = vmatpush1.bf16.msra.mxu0 0
        %1555 = vmatprep.subr.bf16.mxu0 0
        %1556 = vmatpush1.bf16.msra.mxu0 0
        %1557 = vmatprep.subr.bf16.mxu0 0
        %1558 = vmatpush1.bf16.msra.mxu0 %v1541
        %1559 = vmatprep.subr.bf16.mxu0 0
        %1560 = vmatpush2.bf16.msra.mxu0 0
        %1561 = vmatprep.subr.bf16.mxu0 0
        %1562 = vmatpush2.bf16.msra.mxu0 0
        %1563 = vmatprep.subr.bf16.mxu0 0
        %1564 = vmatpush2.bf16.msra.mxu0 0
        %1565 = vmatprep.subr.bf16.mxu0 0
        %1566 = vmatpush2.bf16.msra.mxu0 0
        %1567 = vmatprep.subr.bf16.mxu0 0
        %1568 = vmatpush2.bf16.msra.mxu0 0
        %1569 = vmatprep.subr.bf16.mxu0 0
        %1570 = vmatpush2.bf16.msra.mxu0 0
        %1571 = vmatprep.subr.bf16.mxu0 0
        %1572 = vmatpush2.bf16.msra.mxu0 0
        %1573 = vmatprep.subr.bf16.mxu0 0
        %1574 = vmatpush2.bf16.msra.mxu0 0
        %1575 = vmatprep.mubr.bf16.mxu0 0
        %1576 = vmatmul.mubr.bf16.gmra.mxu0 %v1538
        %v1577 = vpop.f32.mrf.mxu0
        %v1578 = vadd.f32 0.0, %v1577
        %v1579 = vpop.f32.mrf.mxu0
        %v1580 = vpop.f32.mrf.mxu0
        %v1581 = vpop.f32.mrf.mxu0
        %1582 = vdwg.mxu0
        %v1584 = vsel %vm1219, %v1443, 0
        %v1587 = vsel %vm1447, %v1218, 0
        %1589 = vmatprep.subr.bf16.mxu0 0
        %1590 = vmatpush1.bf16.msra.mxu0 0
        %1591 = vmatprep.subr.bf16.mxu0 0
        %1592 = vmatpush1.bf16.msra.mxu0 0
        %1593 = vmatprep.subr.bf16.mxu0 0
        %1594 = vmatpush1.bf16.msra.mxu0 0
        %1595 = vmatprep.subr.bf16.mxu0 0
        %1596 = vmatpush1.bf16.msra.mxu0 0
        %1597 = vmatprep.subr.bf16.mxu0 0
        %1598 = vmatpush1.bf16.msra.mxu0 0
        %1599 = vmatprep.subr.bf16.mxu0 0
        %1600 = vmatpush1.bf16.msra.mxu0 0
        %1601 = vmatprep.subr.bf16.mxu0 0
        %1602 = vmatpush1.bf16.msra.mxu0 0
        %1603 = vmatprep.subr.bf16.mxu0 0
        %1604 = vmatpush1.bf16.msra.mxu0 %v1587
        %1605 = vmatprep.subr.bf16.mxu0 0
        %1606 = vmatpush2.bf16.msra.mxu0 0
        %1607 = vmatprep.subr.bf16.mxu0 0
        %1608 = vmatpush2.bf16.msra.mxu0 0
        %1609 = vmatprep.subr.bf16.mxu0 0
        %1610 = vmatpush2.bf16.msra.mxu0 0
        %1611 = vmatprep.subr.bf16.mxu0 0
        %1612 = vmatpush2.bf16.msra.mxu0 0
        %1613 = vmatprep.subr.bf16.mxu0 0
        %1614 = vmatpush2.bf16.msra.mxu0 0
        %1615 = vmatprep.subr.bf16.mxu0 0
        %1616 = vmatpush2.bf16.msra.mxu0 0
        %1617 = vmatprep.subr.bf16.mxu0 0
        %1618 = vmatpush2.bf16.msra.mxu0 0
        %1619 = vmatprep.subr.bf16.mxu0 0
        %1620 = vmatpush2.bf16.msra.mxu0 0
        %1621 = vmatprep.mubr.bf16.mxu0 0
        %1622 = vmatmul.mubr.bf16.gmra.mxu0 %v1584
        %v1623 = vpop.f32.mrf.mxu0
        %v1624 = vadd.f32 0.0, %v1623
        %v1625 = vpop.f32.mrf.mxu0
        %v1626 = vpop.f32.mrf.mxu0
        %v1627 = vpop.f32.mrf.mxu0
        %1628 = vdwg.mxu0
        %v1629 = vrcp.pop %v1430
        %v1630 = vrcp.pop %v1433
        %v1631 = vrcp.pop %v1436
        %v1632 = vrcp.pop %v1439
        %v1633 = vmul.f32 %v1486, %v1629
        %v1634 = vmul.f32 %v1532, %v1630
        %v1635 = vmul.f32 %v1578, %v1631
        %v1636 = vmul.f32 %v1624, %v1632
        %v1637 = vpack.c.bf16 %v1633, %v1633
        %v1639 = vunpack.c.l.s4 1983009808
        %v1640 = vunpack.c.0.s8 %v1639
        %v1641 = vlaneseq
        %v1642 = vshrl.u32 %v1641, 7
        %v1643 = vsub.s32 %v1640, %v1642
        %v1644 = vrot.slane %v1637, %v1643
        %v1645 = vpack.c.bf16 %v1635, %v1635
        %v1647 = vunpack.c.l.s4 1983009808
        %v1648 = vunpack.c.0.s8 %v1647
        %v1649 = vlaneseq
        %v1650 = vshrl.u32 %v1649, 7
        %v1651 = vsub.s32 %v1648, %v1650
        %v1652 = vrot.slane %v1645, %v1651
        %v1653 = vcombine.low %v1644, %v1652
        %v1654 = vcombine.high %v1644, %v1652
        %v1656 = vunpack.c.l.s4 1934713408
        %v1657 = vunpack.c.0.s8 %v1656
        %v1658 = vlaneseq
        %v1659 = vshrl.u32 %v1658, 7
        %v1660 = vsub.s32 %v1657, %v1659
        %v1661 = vrot.slane %v1653, %v1660
        %v1663 = vunpack.c.l.s4 1934713408
        %v1664 = vunpack.c.0.s8 %v1663
        %v1665 = vlaneseq
        %v1666 = vshrl.u32 %v1665, 7
        %v1667 = vsub.s32 %v1664, %v1666
        %v1668 = vrot.slane %v1654, %v1667
        %v1669 = vcombine.high %v1661, 0
        %v1670 = vcombine.high %v1668, 0
        %v1671 = vpack.c.bf16 %v1634, %v1634
        %v1673 = vunpack.c.l.s4 1983009808
        %v1674 = vunpack.c.0.s8 %v1673
        %v1675 = vlaneseq
        %v1676 = vshrl.u32 %v1675, 7
        %v1677 = vsub.s32 %v1674, %v1676
        %v1678 = vrot.slane %v1671, %v1677
        %v1679 = vpack.c.bf16 %v1636, %v1636
        %v1681 = vunpack.c.l.s4 1983009808
        %v1682 = vunpack.c.0.s8 %v1681
        %v1683 = vlaneseq
        %v1684 = vshrl.u32 %v1683, 7
        %v1685 = vsub.s32 %v1682, %v1684
        %v1686 = vrot.slane %v1679, %v1685
        %v1687 = vcombine.low %v1678, %v1686
        %v1688 = vcombine.high %v1678, %v1686
        %v1690 = vunpack.c.l.s4 1934713408
        %v1691 = vunpack.c.0.s8 %v1690
        %v1692 = vlaneseq
        %v1693 = vshrl.u32 %v1692, 7
        %v1694 = vsub.s32 %v1691, %v1693
        %v1695 = vrot.slane %v1687, %v1694
        %v1697 = vunpack.c.l.s4 1934713408
        %v1698 = vunpack.c.0.s8 %v1697
        %v1699 = vlaneseq
        %v1700 = vshrl.u32 %v1699, 7
        %v1701 = vsub.s32 %v1698, %v1700
        %v1702 = vrot.slane %v1688, %v1701
        %v1703 = vcombine.high %v1695, 0
        %v1704 = vcombine.high %v1702, 0
        %v1707 = vpack.i.b16 %v1695, %v1661
        %v1709 = vshrl.u32 %v1661, 16
        %v1710 = vshrl.u32 %v1695, 16
        %v1711 = vpack.i.b16 %v1710, %v1709
        %v1715 = vpack.i.b16 %v1703, %v1669
        %v1717 = vshrl.u32 %v1669, 16
        %v1718 = vshrl.u32 %v1703, 16
        %v1719 = vpack.i.b16 %v1718, %v1717
        %v1723 = vpack.i.b16 %v1702, %v1668
        %v1725 = vshrl.u32 %v1668, 16
        %v1726 = vshrl.u32 %v1702, 16
        %v1727 = vpack.i.b16 %v1726, %v1725
        %v1731 = vpack.i.b16 %v1704, %v1670
        %v1733 = vshrl.u32 %v1670, 16
        %v1734 = vshrl.u32 %v1704, 16
        %v1735 = vpack.i.b16 %v1734, %v1733
        %v1737 = vcombine.low %v1707, %v1723
        %v1739 = vunpack.c.l.s4 1983009808
        %v1740 = vunpack.c.0.s8 %v1739
        %v1741 = vlaneseq
        %v1742 = vshrl.u32 %v1741, 7
        %v1743 = vsub.s32 %v1740, %v1742
        %v1744 = vrot.slane %v1737, %v1743
        %v1745 = vcombine.low %v1715, %v1731
        %v1747 = vunpack.c.l.s4 1983009808
        %v1748 = vunpack.c.0.s8 %v1747
        %v1749 = vlaneseq
        %v1750 = vshrl.u32 %v1749, 7
        %v1751 = vsub.s32 %v1748, %v1750
        %v1752 = vrot.slane %v1745, %v1751
        %v1753 = vcombine.low %v1744, %v1752
        %v1755 = vunpack.c.l.s4 1934713408
        %v1756 = vunpack.c.0.s8 %v1755
        %v1757 = vlaneseq
        %v1758 = vshrl.u32 %v1757, 7
        %v1759 = vsub.s32 %v1756, %v1758
        %v1760 = vrot.slane %v1753, %v1759
        %v1761 = vcombine.high %v1760, 0
        %v1762 = vcombine.low %v1711, %v1727
        %v1764 = vunpack.c.l.s4 1983009808
        %v1765 = vunpack.c.0.s8 %v1764
        %v1766 = vlaneseq
        %v1767 = vshrl.u32 %v1766, 7
        %v1768 = vsub.s32 %v1765, %v1767
        %v1769 = vrot.slane %v1762, %v1768
        %v1770 = vcombine.low %v1719, %v1735
        %v1772 = vunpack.c.l.s4 1983009808
        %v1773 = vunpack.c.0.s8 %v1772
        %v1774 = vlaneseq
        %v1775 = vshrl.u32 %v1774, 7
        %v1776 = vsub.s32 %v1773, %v1775
        %v1777 = vrot.slane %v1770, %v1776
        %v1778 = vcombine.low %v1769, %v1777
        %v1780 = vunpack.c.l.s4 1934713408
        %v1781 = vunpack.c.0.s8 %v1780
        %v1782 = vlaneseq
        %v1783 = vshrl.u32 %v1782, 7
        %v1784 = vsub.s32 %v1781, %v1783
        %v1785 = vrot.slane %v1778, %v1784
        %v1786 = vcombine.high %v1785, 0
        %v1789 = vpack.i.b16 %v1785, %v1760
        %v1790 = vshrl.u32 %v1760, 16
        %v1791 = vshrl.u32 %v1785, 16
        %v1792 = vpack.i.b16 %v1791, %v1790
        %v1795 = vpack.i.b16 %v1786, %v1761
        %v1796 = vshrl.u32 %v1761, 16
        %v1797 = vshrl.u32 %v1786, 16
        %v1798 = vpack.i.b16 %v1797, %v1796
        %1799 = vrot.lane.b32.xlu0 %v1792, 8
        %v1800 = vpop.permute.xlu0 %1799
        %1801 = vrot.lane.b32.xlu0 %v1795, 16
        %v1802 = vpop.permute.xlu0 %1801
        %1803 = vrot.lane.b32.xlu0 %v1798, 24
        %v1804 = vpop.permute.xlu0 %1803
        %v1807 = vsel %vm1219, %v1789, %v1800
        %vm1808 = vcmask 130048
        %v1810 = vsel %vm1808, %v1807, %v1802
        %vm1811 = vcmask 195584
        %v1813 = vsel %vm1811, %v1810, %v1804
        %v1814 = vld [vmem:[#allocation4] sm:$0xf]
        %v1815 = vld [vmem:[#allocation4 + $0x4] sm:$0xf]
        %v1816 = vld [vmem:[#allocation4 + $0x8] sm:$0xf]
        %v1817 = vld [vmem:[#allocation4 + $0xc] sm:$0xf]
        %v1822 = vunpack.c.l.b16 %v1814
        %v1823 = vunpack.c.l.b16 %v1815
        %v1824 = vunpack.c.l.b16 %v1816
        %v1825 = vunpack.c.l.b16 %v1817
        %v1826 = vpack.c.b16 %v1823, %v1822
        %v1827 = vpack.c.b16 %v1825, %v1824
        %v1830 = vsel %vm966, %v1813, 0
        %1832 = vmatprep.subr.bf16.mxu0 0
        %1833 = vmatpush1.bf16.msra.mxu0 0
        %1834 = vmatprep.subr.bf16.mxu0 0
        %1835 = vmatpush1.bf16.msra.mxu0 0
        %1836 = vmatprep.subr.bf16.mxu0 0
        %1837 = vmatpush1.bf16.msra.mxu0 0
        %1838 = vmatprep.subr.bf16.mxu0 0
        %1839 = vmatpush1.bf16.msra.mxu0 0
        %1840 = vmatprep.subr.bf16.mxu0 0
        %1841 = vmatpush1.bf16.msra.mxu0 0
        %1842 = vmatprep.subr.bf16.mxu0 0
        %1843 = vmatpush1.bf16.msra.mxu0 0
        %1844 = vmatprep.subr.bf16.mxu0 0
        %1845 = vmatpush1.bf16.msra.mxu0 %v1827
        %1846 = vmatprep.subr.bf16.mxu0 0
        %1847 = vmatpush1.bf16.msra.mxu0 %v1826
        %1848 = vmatprep.subr.bf16.mxu0 0
        %1849 = vmatpush2.bf16.msra.mxu0 0
        %1850 = vmatprep.subr.bf16.mxu0 0
        %1851 = vmatpush2.bf16.msra.mxu0 0
        %1852 = vmatprep.subr.bf16.mxu0 0
        %1853 = vmatpush2.bf16.msra.mxu0 0
        %1854 = vmatprep.subr.bf16.mxu0 0
        %1855 = vmatpush2.bf16.msra.mxu0 0
        %1856 = vmatprep.subr.bf16.mxu0 0
        %1857 = vmatpush2.bf16.msra.mxu0 0
        %1858 = vmatprep.subr.bf16.mxu0 0
        %1859 = vmatpush2.bf16.msra.mxu0 0
        %1860 = vmatprep.subr.bf16.mxu0 0
        %1861 = vmatpush2.bf16.msra.mxu0 0
        %1862 = vmatprep.subr.bf16.mxu0 0
        %1863 = vmatpush2.bf16.msra.mxu0 0
        %1864 = vmatprep.mubr.bf16.mxu0 0
        %1865 = vmatmul.mubr.bf16.gmra.mxu0 %v1830
        %v1866 = vpop.f32.mrf.mxu0
        %v1867 = vadd.f32 %v964, %v1866
        %v1868 = vpop.f32.mrf.mxu0
        %v1869 = vpop.f32.mrf.mxu0
        %v1870 = vpop.f32.mrf.mxu0
        %1871 = vdwg.mxu0
        %v1872 = vmul.f32 %v1867, %v1867
        %v1873 = vsel %vm966, %v1872, 0.0
        %1874 = vadd.xlane.f32.xlu0 %v1873
        %v1875 = vpop.xlane.xlu0 %1874
        %v1876 = vmul.f32 %v1875, %v970
        %v1877 = vadd.f32 %v1876, 1e-06
        %v1878 = vrsqrt.pop %v1877
        %v1879 = vmul.f32 %v1867, %v1878
        %v1881 = vlaneseq
        %v1882 = vshrl.u32 %v1881, 7
        %v1883 = vsub.s32 0, %v1882
        %v1884 = vrot.slane %v470, %v1883
        %v1886 = vmul.f32 %v1879, %v1884
        %v1887 = vpack.c.bf16 %v1886, %v1886
        %v1888 = vld [vmem:[#allocation7] sm:$0xf]
        %v1889 = vld [vmem:[#allocation7 + $0x4] sm:$0xf]
        %v1890 = vld [vmem:[#allocation7 + $0x8] sm:$0xf]
        %v1891 = vld [vmem:[#allocation7 + $0xc] sm:$0xf]
        %v1896 = vunpack.c.l.b16 %v1888
        %v1897 = vunpack.c.l.b16 %v1889
        %v1898 = vunpack.c.l.b16 %v1890
        %v1899 = vunpack.c.l.b16 %v1891
        %v1900 = vpack.c.b16 %v1897, %v1896
        %v1901 = vpack.c.b16 %v1899, %v1898
        %v1905 = vsel %vm966, %v1887, 0
        %1907 = vmatprep.subr.bf16.mxu0 0
        %1908 = vmatpush1.bf16.msra.mxu0 0
        %1909 = vmatprep.subr.bf16.mxu0 0
        %1910 = vmatpush1.bf16.msra.mxu0 0
        %1911 = vmatprep.subr.bf16.mxu0 0
        %1912 = vmatpush1.bf16.msra.mxu0 0
        %1913 = vmatprep.subr.bf16.mxu0 0
        %1914 = vmatpush1.bf16.msra.mxu0 0
        %1915 = vmatprep.subr.bf16.mxu0 0
        %1916 = vmatpush1.bf16.msra.mxu0 0
        %1917 = vmatprep.subr.bf16.mxu0 0
        %1918 = vmatpush1.bf16.msra.mxu0 0
        %1919 = vmatprep.subr.bf16.mxu0 0
        %1920 = vmatpush1.bf16.msra.mxu0 %v1901
        %1921 = vmatprep.subr.bf16.mxu0 0
        %1922 = vmatpush1.bf16.msra.mxu0 %v1900
        %1923 = vmatprep.subr.bf16.mxu0 0
        %1924 = vmatpush2.bf16.msra.mxu0 0
        %1925 = vmatprep.subr.bf16.mxu0 0
        %1926 = vmatpush2.bf16.msra.mxu0 0
        %1927 = vmatprep.subr.bf16.mxu0 0
        %1928 = vmatpush2.bf16.msra.mxu0 0
        %1929 = vmatprep.subr.bf16.mxu0 0
        %1930 = vmatpush2.bf16.msra.mxu0 0
        %1931 = vmatprep.subr.bf16.mxu0 0
        %1932 = vmatpush2.bf16.msra.mxu0 0
        %1933 = vmatprep.subr.bf16.mxu0 0
        %1934 = vmatpush2.bf16.msra.mxu0 0
        %1935 = vmatprep.subr.bf16.mxu0 0
        %1936 = vmatpush2.bf16.msra.mxu0 0
        %1937 = vmatprep.subr.bf16.mxu0 0
        %1938 = vmatpush2.bf16.msra.mxu0 0
        %1939 = vmatprep.mubr.bf16.mxu0 0
        %1940 = vmatmul.mubr.bf16.gmra.mxu0 %v1905
        %v1941 = vpop.f32.mrf.mxu0
        %v1942 = vadd.f32 0.0, %v1941
        %v1943 = vpop.f32.mrf.mxu0
        %v1944 = vpop.f32.mrf.mxu0
        %v1945 = vpop.f32.mrf.mxu0
        %1946 = vdwg.mxu0
        %v1947 = vmul.f32 %v1942, 0.5
        %v1948 = vmul.f32 %v1942, 0.044715
        %v1949 = vmul.f32 %v1948, %v1942
        %v1950 = vmul.f32 %v1949, %v1942
        %v1951 = vadd.f32 %v1942, %v1950
        %v1952 = vmul.f32 %v1951, 0.7978846
        %v1953 = vtanh.pop %v1952
        %v1954 = vadd.f32 %v1953, 1.0
        %v1955 = vmul.f32 %v1947, %v1954
        %v1956 = vld [vmem:[#allocation9] sm:$0xf]
        %v1957 = vld [vmem:[#allocation9 + $0x4] sm:$0xf]
        %v1958 = vld [vmem:[#allocation9 + $0x8] sm:$0xf]
        %v1959 = vld [vmem:[#allocation9 + $0xc] sm:$0xf]
        %v1964 = vunpack.c.l.b16 %v1956
        %v1965 = vunpack.c.l.b16 %v1957
        %v1966 = vunpack.c.l.b16 %v1958
        %v1967 = vunpack.c.l.b16 %v1959
        %v1968 = vpack.c.b16 %v1965, %v1964
        %v1969 = vpack.c.b16 %v1967, %v1966
        %1972 = vmatprep.subr.bf16.mxu0 0
        %1973 = vmatpush1.bf16.msra.mxu0 0
        %1974 = vmatprep.subr.bf16.mxu0 0
        %1975 = vmatpush1.bf16.msra.mxu0 0
        %1976 = vmatprep.subr.bf16.mxu0 0
        %1977 = vmatpush1.bf16.msra.mxu0 0
        %1978 = vmatprep.subr.bf16.mxu0 0
        %1979 = vmatpush1.bf16.msra.mxu0 0
        %1980 = vmatprep.subr.bf16.mxu0 0
        %1981 = vmatpush1.bf16.msra.mxu0 0
        %1982 = vmatprep.subr.bf16.mxu0 0
        %1983 = vmatpush1.bf16.msra.mxu0 0
        %1984 = vmatprep.subr.bf16.mxu0 0
        %1985 = vmatpush1.bf16.msra.mxu0 %v1969
        %1986 = vmatprep.subr.bf16.mxu0 0
        %1987 = vmatpush1.bf16.msra.mxu0 %v1968
        %1988 = vmatprep.subr.bf16.mxu0 0
        %1989 = vmatpush2.bf16.msra.mxu0 0
        %1990 = vmatprep.subr.bf16.mxu0 0
        %1991 = vmatpush2.bf16.msra.mxu0 0
        %1992 = vmatprep.subr.bf16.mxu0 0
        %1993 = vmatpush2.bf16.msra.mxu0 0
        %1994 = vmatprep.subr.bf16.mxu0 0
        %1995 = vmatpush2.bf16.msra.mxu0 0
        %1996 = vmatprep.subr.bf16.mxu0 0
        %1997 = vmatpush2.bf16.msra.mxu0 0
        %1998 = vmatprep.subr.bf16.mxu0 0
        %1999 = vmatpush2.bf16.msra.mxu0 0
        %2000 = vmatprep.subr.bf16.mxu0 0
        %2001 = vmatpush2.bf16.msra.mxu0 0
        %2002 = vmatprep.subr.bf16.mxu0 0
        %2003 = vmatpush2.bf16.msra.mxu0 0
        %2004 = vmatprep.mubr.bf16.mxu0 0
        %2005 = vmatmul.mubr.bf16.gmra.mxu0 %v1905
        %v2006 = vpop.f32.mrf.mxu0
        %v2007 = vadd.f32 0.0, %v2006
        %v2008 = vpop.f32.mrf.mxu0
        %v2009 = vpop.f32.mrf.mxu0
        %v2010 = vpop.f32.mrf.mxu0
        %2011 = vdwg.mxu0
        %v2012 = vmul.f32 %v1955, %v2007
        %v2013 = vpack.c.bf16 %v2012, %v2012
        %v2014 = vld [vmem:[%s10] sm:$0xf]
        %v2015 = vld [vmem:[%s10 + $0x4] sm:$0xf]
        %v2016 = vld [vmem:[%s10 + $0x8] sm:$0xf]
        %v2017 = vld [vmem:[%s10 + $0xc] sm:$0xf]
        %v2018 = vld [vmem:[%s10 + $0x10] sm:$0xf]
        %v2019 = vld [vmem:[%s10 + $0x14] sm:$0xf]
        %v2020 = vld [vmem:[%s10 + $0x18] sm:$0xf]
        %v2021 = vld [vmem:[%s10 + $0x1c] sm:$0xf]
        %v2022 = vld [vmem:[%s10 + $0x20] sm:$0xf]
        %v2023 = vld [vmem:[%s10 + $0x24] sm:$0xf]
        %v2024 = vld [vmem:[%s10 + $0x28] sm:$0xf]
        %v2025 = vld [vmem:[%s10 + $0x2c] sm:$0xf]
        %v2026 = vld [vmem:[%s10 + $0x30] sm:$0xf]
        %v2027 = vld [vmem:[%s10 + $0x34] sm:$0xf]
        %v2028 = vld [vmem:[%s10 + $0x38] sm:$0xf]
        %v2029 = vld [vmem:[%s10 + $0x3c] sm:$0xf]
        %v2046 = vunpack.c.l.b16 %v2014
        %v2047 = vunpack.c.l.b16 %v2015
        %v2048 = vunpack.c.l.b16 %v2016
        %v2049 = vunpack.c.l.b16 %v2017
        %v2050 = vunpack.c.l.b16 %v2018
        %v2051 = vunpack.c.l.b16 %v2019
        %v2052 = vunpack.c.l.b16 %v2020
        %v2053 = vunpack.c.l.b16 %v2021
        %v2054 = vunpack.c.l.b16 %v2022
        %v2055 = vunpack.c.l.b16 %v2023
        %v2056 = vunpack.c.l.b16 %v2024
        %v2057 = vunpack.c.l.b16 %v2025
        %v2058 = vunpack.c.l.b16 %v2026
        %v2059 = vunpack.c.l.b16 %v2027
        %v2060 = vunpack.c.l.b16 %v2028
        %v2061 = vunpack.c.l.b16 %v2029
        %v2062 = vpack.c.b16 %v2047, %v2046
        %v2063 = vpack.c.b16 %v2049, %v2048
        %v2064 = vpack.c.b16 %v2051, %v2050
        %v2065 = vpack.c.b16 %v2053, %v2052
        %v2066 = vpack.c.b16 %v2055, %v2054
        %v2067 = vpack.c.b16 %v2057, %v2056
        %v2068 = vpack.c.b16 %v2059, %v2058
        %v2069 = vpack.c.b16 %v2061, %v2060
        %2078 = vmatprep.subr.bf16.mxu0 0
        %2079 = vmatpush1.bf16.msra.mxu0 %v2069
        %2080 = vmatprep.subr.bf16.mxu0 0
        %2081 = vmatpush1.bf16.msra.mxu0 %v2068
        %2082 = vmatprep.subr.bf16.mxu0 0
        %2083 = vmatpush1.bf16.msra.mxu0 %v2067
        %2084 = vmatprep.subr.bf16.mxu0 0
        %2085 = vmatpush1.bf16.msra.mxu0 %v2066
        %2086 = vmatprep.subr.bf16.mxu0 0
        %2087 = vmatpush1.bf16.msra.mxu0 %v2065
        %2088 = vmatprep.subr.bf16.mxu0 0
        %2089 = vmatpush1.bf16.msra.mxu0 %v2064
        %2090 = vmatprep.subr.bf16.mxu0 0
        %2091 = vmatpush1.bf16.msra.mxu0 %v2063
        %2092 = vmatprep.subr.bf16.mxu0 0
        %2093 = vmatpush1.bf16.msra.mxu0 %v2062
        %2094 = vmatprep.subr.bf16.mxu0 0
        %2095 = vmatpush2.bf16.msra.mxu0 0
        %2096 = vmatprep.subr.bf16.mxu0 0
        %2097 = vmatpush2.bf16.msra.mxu0 0
        %2098 = vmatprep.subr.bf16.mxu0 0
        %2099 = vmatpush2.bf16.msra.mxu0 0
        %2100 = vmatprep.subr.bf16.mxu0 0
        %2101 = vmatpush2.bf16.msra.mxu0 0
        %2102 = vmatprep.subr.bf16.mxu0 0
        %2103 = vmatpush2.bf16.msra.mxu0 0
        %2104 = vmatprep.subr.bf16.mxu0 0
        %2105 = vmatpush2.bf16.msra.mxu0 0
        %2106 = vmatprep.subr.bf16.mxu0 0
        %2107 = vmatpush2.bf16.msra.mxu0 0
        %2108 = vmatprep.subr.bf16.mxu0 0
        %2109 = vmatpush2.bf16.msra.mxu0 0
        %2110 = vmatprep.mubr.bf16.mxu0 0
        %2111 = vmatmul.mubr.bf16.gmra.mxu0 %v2013
        %v2112 = vpop.f32.mrf.mxu0
        %v2113 = vadd.f32 %v1867, %v2112
        %v2114 = vpop.f32.mrf.mxu0
        %v2115 = vpop.f32.mrf.mxu0
        %v2116 = vpop.f32.mrf.mxu0
        %2117 = vdwg.mxu0
        %2118 = vst.msk [vmem:[%s456] sm:$0xff] %vm966, %v2113
        %s2119 = sand.u32 %s292, 1
        %s2120 = scalar_lea.sflag [#allocation6], %s2119
        %s2121 = sand.u32 %s292, 1
        %s2122 = smul.addr %s2121, 8
        %s2123 = scalar_lea.vmem [#allocation10], %s2122
        // Predicated region
        $region81: #{tpu_custom_call.1} parent=63 // pred_check
          %p2124 = pneg %p302
        $region82: #{tpu_custom_call.1} parent=63 // pred_check_branch
          %2126 = sbr.rel (%p2124) target = $region84
        $region83: #{tpu_custom_call.1} parent=63 // pred_region
          %s2128 = ssub.s32 128, 128
          %2129 = vsyncadd %s2120, %s2128
          %s2130 = sadd.s32 %s32, %s31
          %s2131 = smul.addr %s2130, 128
          %s2132 = scalar_lea.hbm %s11, %s2131
          %s2134 = sshll.u32 %s2123, 4
          %s2135 = int_to_ptr.vmem [resolvable:$true] %s2134
          %2137 = dma.vmem_to_hbm [thread:$0]  %s2135, 128, %s2132, %s2120
        $region84: #{tpu_custom_call.1} parent=63 // pred_fallthru
          _
      $region64: #{tpu_custom_call.1} parent=5 // pred_fallthru
        _
      %p2138 = scmp.le.s32.totalorder 2, %s22
      // Predicated region
      $region85: #{tpu_custom_call.1} parent=5 // pred_check
        %p2139 = pneg %p2138
      $region86: #{tpu_custom_call.1} parent=5 // pred_check_branch
        %2141 = sbr.rel (%p2139) target = $region88
      $region87: #{tpu_custom_call.1} parent=5 // pred_region
        %s2142 = ssub.s32 %s22, 2
        // Predicated region
        $region89: #{tpu_custom_call.1} parent=87 // pred_check
          %p2143 = pneg %p308
        $region90: #{tpu_custom_call.1} parent=87 // pred_check_branch
          %2145 = sbr.rel (%p2143) target = $region92
        $region91: #{tpu_custom_call.1} parent=87 // pred_region
          %s2146 = sand.u32 %s293, 1
          %s2147 = scalar_lea.sflag [#allocation6], %s2146
          %s2148 = sand.u32 %s293, 1
          %s2149 = smul.addr %s2148, 8
          %s2150 = scalar_lea.vmem [#allocation10], %s2149
          %2151 = dma.done %s2147, 128
        $region92: #{tpu_custom_call.1} parent=87 // pred_fallthru
          _
      $region88: #{tpu_custom_call.1} parent=5 // pred_fallthru
        _
    $region6: #{tpu_custom_call.1} parent=1 // loop_footer
      %s26 = sadd.s32 1, %s22
    $region7: #{tpu_custom_call.1} parent=1 // loop_footer_branch
      %21 = sbr.rel target = $region3
    $region8: #{tpu_custom_call.1} parent=1 // loop_exit
      _
    %2152 = vsyncpa [#allocation5], 1
    %s2153 = scalar_lea.sflag [#allocation5], 1
    %2154 = vsyncpa %s2153, 1
    %2155 = vsyncpa [#allocation8], 1
    %2156 = vsyncpa [#allocation6], 1
    %s2157 = scalar_lea.sflag [#allocation6], 1
    %2158 = vsyncpa %s2157, 1

</llo_original>
